<compile_context>
chip_gen: v5e
topology: v5e:2x2
jax: 0.10.0
libtpu: 0.0.40
codegen_flags: <defaults>
</compile_context>

<pallas_src>
import functools
import math

import numpy as np
import jax
import jax.numpy as jnp
from jax import lax
from jax.experimental import pallas as pl
from jax.experimental.pallas import tpu as pltpu


# ----------------------------------------------------------------------------
# Hardware-aware sizing
# ----------------------------------------------------------------------------
def _vmem_capacity_bytes():
    try:
        info = pltpu.get_tpu_info()
        for name in ("vmem_capacity_bytes", "vmem_size_bytes", "vmem_bytes"):
            v = getattr(info, name, None)
            if v:
                return int(v)
    except Exception:
        pass
    return 64 * 1024 * 1024          # conservative (v7x-sized) fallback


_VMEM_CAP = _vmem_capacity_bytes()
_SMALL_VMEM = _VMEM_CAP <= (64 * 1024 * 1024) + (1 << 20)
_WORK_BUDGET = (18 << 20) if _SMALL_VMEM else (34 << 20)
_VMEM_LIMIT = int(min(_VMEM_CAP * 0.70,
                      (44 << 20) if _SMALL_VMEM else (96 << 20)))

_K_UNROLL_LIMIT = 48      # beyond this, gather patches in glue (PQMF only)
_MAX_GROUP_TILE = 32
_MAX_M_TILE = 256


def _divisors(n):
    return [d for d in range(1, n + 1) if n % d == 0]


# ----------------------------------------------------------------------------
# Pallas kernel: grouped, multi-branch conv as (VMEM patches) @ W on the MXU
# ----------------------------------------------------------------------------
def _gconv_kernel(*refs, nb, Ks, dils, offs, cin_g, t_out, slope):
    """refs = w_0, b_0, ..., w_{nb-1}, b_{nb-1}, x, out[, patches_scratch]

      w_j : (Gb, Mt, K_j*cin_g)   contraction index = k*cin_g + c
      b_j : (Gb, Mt, 1)
      x   : (Gb, cin_g, Tin)
      out : (Gb, Mt, t_out)
      patches_scratch : (Gb, max_j K_j*cin_g, t_out)   (only if some K_j > 1)

    out = sum_j act( W_j @ patches_j(x) + b_j )   with act = leaky_relu(slope)
    """
    need_scratch = any(k > 1 for k in Ks)
    x_ref = refs[2 * nb]
    o_ref = refs[2 * nb + 1]
    p_ref = refs[2 * nb + 2] if need_scratch else None

    total = None
    for j in range(nb):
        w_ref = refs[2 * j]
        b_ref = refs[2 * j + 1]
        k_taps, dil, off = Ks[j], dils[j], offs[j]

        if k_taps == 1:
            patches = x_ref[:, :, off:off + t_out]
        else:
            # build the patch matrix in VMEM: row block k <- shifted x slice
            for k in range(k_taps):
                s0 = off + k * dil
                p_ref[:, k * cin_g:(k + 1) * cin_g, :] = \
                    x_ref[:, :, s0:s0 + t_out]
            patches = p_ref[:, :k_taps * cin_g, :]

        w = w_ref[...]
        if w.shape[0] == 1:                       # common case: plain 2-D dot
            acc = lax.dot_general(
                w[0], patches[0],
                dimension_numbers=(((1,), (0,)), ((), ())),
                preferred_element_type=jnp.float32)[None]
        else:                                     # batched over the group tile
            acc = lax.dot_general(
                w, patches,
                dimension_numbers=(((2,), (1,)), ((0,), (0,))),
                preferred_element_type=jnp.float32)
        acc = acc + b_ref[...]
        if slope is not None:
            acc = jnp.where(acc >= 0, acc, slope * acc)
        total = acc if total is None else total + acc

    o_ref[...] = total.astype(o_ref.dtype)


def grouped_conv_pallas(x, branches, *, stride=1, groups=1, leaky_slope=None):
    """sum_j act(Conv1d(x, w_j, b_j, dilation=d_j, padding=p_j)) with shared
    stride / groups (PyTorch semantics).  branches: [{w, b, dilation, padding}]."""
    x = jnp.asarray(x, jnp.float32)
    N, Cin, T = x.shape
    nb = len(branches)
    Cout = branches[0]["w"].shape[0]
    Cin_g = Cin // groups
    Cout_g = Cout // groups
    G = groups
    assert Cin_g * groups == Cin and Cout_g * groups == Cout

    Ks = [int(br["w"].shape[2]) for br in branches]
    dils = [int(br["dilation"]) for br in branches]
    pads = [int(br["padding"]) for br in branches]
    t_outs = [(T + 2 * p - d * (k - 1) - 1) // stride + 1
              for p, d, k in zip(pads, dils, Ks)]
    T_out = t_outs[0]
    assert T_out > 0 and all(t == T_out for t in t_outs)

    ws = [jnp.asarray(br["w"], jnp.float32) for br in branches]
    bs = [jnp.asarray(br["b"], jnp.float32) for br in branches]

    if stride == 1:
        pad_max = max(pads)
        xk = jnp.pad(x, ((0, 0), (0, 0), (pad_max, pad_max)))
        Tin = T + 2 * pad_max
        cin_g_k = Cin_g
        Ks_k, dils_k = list(Ks), list(dils)
        offs_k = [pad_max - p for p in pads]
        ws_k = ws
    else:
        # Polyphase fold: a stride-s conv == stride-1 conv on the s-phase
        # decomposition of x (Cin_g*s channels, ceil(K/s) taps).
        assert nb == 1 and dils[0] == 1, "strided conv: single branch, dil=1"
        K, p = Ks[0], pads[0]
        Kq = -(-K // stride)
        U = T_out + Kq - 1
        need = stride * U
        right = max(0, need - (T + p))
        xp = jnp.pad(x, ((0, 0), (0, 0), (p, right)))[:, :, :need]
        xk = (xp.reshape(N, Cin, U, stride)
                .transpose(0, 1, 3, 2)
                .reshape(N, Cin * stride, U))
        w0 = jnp.pad(ws[0], ((0, 0), (0, 0), (0, Kq * stride - K)))
        ws_k = [w0.reshape(Cout, Cin_g, Kq, stride)
                  .transpose(0, 1, 3, 2)
                  .reshape(Cout, Cin_g * stride, Kq)]
        cin_g_k = Cin_g * stride
        Tin = U
        Ks_k, dils_k, offs_k = [Kq], [1], [0]

    # kernel-layout weights: (G, Cout_g, K*cin_g) with index k*cin_g + c
    w2s = [w.reshape(G, Cout_g, cin_g_k, kk)
            .transpose(0, 1, 3, 2)
            .reshape(G, Cout_g, kk * cin_g_k)
           for w, kk in zip(ws_k, Ks_k)]
    b2s = [b.reshape(G, Cout_g, 1) for b in bs]
    x4 = xk.reshape(N, G, cin_g_k, Tin)

    # Very long filters (PQMF analysis): gather patches in glue (small abs.
    # size after the stride fold) and run the kernel with K == 1.
    if nb == 1 and Ks_k[0] > _K_UNROLL_LIMIT:
        K, dil, off = Ks_k[0], dils_k[0], offs_k[0]
        patches = jnp.stack(
            [x4[:, :, :, off + k * dil: off + k * dil + T_out]
             for k in range(K)], axis=2)            # (N, G, K, cin_g, T_out)
        x4 = patches.reshape(N, G, K * cin_g_k, T_out)
        cin_g_k = K * cin_g_k
        Tin = T_out
        Ks_k, dils_k, offs_k = [1], [1], [0]

    Kd_list = [kk * cin_g_k for kk in Ks_k]
    Kd_max = max(Kd_list)
    need_scratch = any(kk > 1 for kk in Ks_k)

    # ---- tile selection under a generation-aware VMEM budget ---------------
    def vmem_est(gb, mt):
        wb = sum(gb * mt * kd for kd in Kd_list) * 4 * 2
        xb = gb * cin_g_k * Tin * 4 * 2
        ob = gb * mt * T_out * 4 * 2
        sb = gb * Kd_max * T_out * 4 if need_scratch else 0
        return wb + xb + ob + sb + (1 << 20)

    g_cands = sorted([d for d in _divisors(G) if d <= _MAX_GROUP_TILE],
                     reverse=True)
    m_cands = sorted({m for m in _divisors(Cout_g)
                      if (m == Cout_g or m % 8 == 0) and m <= _MAX_M_TILE},
                     reverse=True)
    if not m_cands:
        m_cands = [Cout_g]
    Gb, Mt = 1, m_cands[-1]
    found = False
    for gb in g_cands:
        for mt in m_cands:
            if vmem_est(gb, mt) <= _WORK_BUDGET:
                Gb, Mt, found = gb, mt, True
                break
        if found:
            break

    grid = (G // Gb, Cout_g // Mt, N)   # batch innermost -> weights resident
    in_specs, args = [], []
    for j in range(nb):
        in_specs.append(pl.BlockSpec((Gb, Mt, Kd_list[j]),
                                     lambda g, m, n: (g, m, 0)))
        in_specs.append(pl.BlockSpec((Gb, Mt, 1),
                                     lambda g, m, n: (g, m, 0)))
        args.append(w2s[j])
        args.append(b2s[j])
    in_specs.append(pl.BlockSpec((None, Gb, cin_g_k, Tin),
                                 lambda g, m, n: (n, g, 0, 0)))
    args.append(x4)
    out_spec = pl.BlockSpec((None, Gb, Mt, T_out),
                            lambda g, m, n: (n, g, m, 0))
    scratch = ([pltpu.VMEM((Gb, Kd_max, T_out), jnp.float32)]
               if need_scratch else [])

    out = pl.pallas_call(
        functools.partial(_gconv_kernel, nb=nb, Ks=tuple(Ks_k),
                          dils=tuple(dils_k), offs=tuple(offs_k),
                          cin_g=cin_g_k, t_out=T_out, slope=leaky_slope),
        out_shape=jax.ShapeDtypeStruct((N, G, Cout_g, T_out), jnp.float32),
        grid_spec=pltpu.PrefetchScalarGridSpec(
            num_scalar_prefetch=0,
            grid=grid,
            in_specs=in_specs,
            out_specs=out_spec,
            scratch_shapes=scratch),
        compiler_params=pltpu.CompilerParams(
            dimension_semantics=("parallel", "parallel", "parallel"),
            vmem_limit_bytes=_VMEM_LIMIT),
    )(*args)
    return out.reshape(N, Cout, T_out)


def conv1d_pallas(x, w, b, *, stride=1, dilation=1, groups=1, padding=0,
                  leaky_slope=None):
    return grouped_conv_pallas(
        x, [dict(w=w, b=b, dilation=dilation, padding=padding)],
        stride=stride, groups=groups, leaky_slope=leaky_slope)


# ----------------------------------------------------------------------------
# PQMF (analysis only, as used in the forward pass)
# ----------------------------------------------------------------------------
def get_padding(kernel_size, dilation=1):
    return int((kernel_size * dilation - dilation) / 2)


def design_prototype_filter(taps=62, cutoff_ratio=0.142, beta=9.0):
    assert taps % 2 == 0
    assert 0.0 < cutoff_ratio < 1.0
    omega_c = np.pi * cutoff_ratio
    with np.errstate(invalid="ignore"):
        h_i = np.sin(omega_c * (np.arange(taps + 1) - 0.5 * taps)) / (
            np.pi * (np.arange(taps + 1) - 0.5 * taps))
    h_i[taps // 2] = np.cos(0) * cutoff_ratio
    w = np.kaiser(taps + 1, beta)
    return h_i * w


def make_pqmf(subbands, taps, cutoff_ratio, beta):
    h_proto = design_prototype_filter(taps, cutoff_ratio, beta)
    h_analysis = np.zeros((subbands, len(h_proto)))
    for k in range(subbands):
        h_analysis[k] = 2 * h_proto * np.cos(
            (2 * k + 1) * (np.pi / (2 * subbands))
            * (np.arange(taps + 1) - taps / 2) + (-1) ** k * np.pi / 4)
    return {"filter": jnp.asarray(h_analysis, jnp.float32)[:, None, :],
            "subbands": subbands, "taps": taps}


def pqmf_analysis(pq, x, num_bands=None):
    """PQMF analysis with the downsampling stride folded into the conv and
    only the first `num_bands` sub-bands computed (when requested)."""
    sb, taps = pq["subbands"], pq["taps"]
    filt = pq["filter"]
    if num_bands is not None:
        filt = filt[:num_bands]
    zero_b = jnp.zeros((filt.shape[0],), jnp.float32)
    out = conv1d_pallas(x, filt, zero_b, stride=sb, padding=taps // 2)
    # match F.conv1d(., updown_filter, stride=sb) output length exactly
    t_ref = (x.shape[-1] - sb) // sb + 1
    return out[:, :, :t_ref]


# ----------------------------------------------------------------------------
# Deterministic parameter init (weight_norm folded into plain weights)
# ----------------------------------------------------------------------------
_KEY = jax.random.PRNGKey(0)
_CNT = [0]


def _next_key():
    _CNT[0] += 1
    return jax.random.fold_in(_KEY, _CNT[0])


def init_conv(cout, cin, k, groups=1):
    cin_g = cin // groups
    scale = 0.1 / math.sqrt(cin_g * k)
    w = jax.random.normal(_next_key(), (cout, cin_g, k), jnp.float32) * scale
    b = jax.random.normal(_next_key(), (cout,), jnp.float32) * scale
    return {"w": w, "b": b}


# ----------------------------------------------------------------------------
# CoMBD
# ----------------------------------------------------------------------------
def build_combd_block(h_u, d_k, d_s, d_d, d_g, d_p, op_f, op_k, op_g):
    filters = [[1, h_u[0]]]
    for i in range(len(h_u) - 1):
        filters.append([h_u[i], h_u[i + 1]])
    convs = []
    for _f, _k, _s, _d, _g, _p in zip(filters, d_k, d_s, d_d, d_g, d_p):
        c = init_conv(_f[1], _f[0], _k, groups=_g)
        c.update(dict(s=_s, d=_d, g=_g, p=_p))
        convs.append(c)
    proj = init_conv(op_f, filters[-1][1], op_k, groups=op_g)
    proj.update(dict(s=1, d=1, g=op_g, p=0))
    return {"convs": convs, "proj": proj}


def combd_block_forward(params, x, b_y, b_y_hat):
    fmap_r, fmap_g = [], []
    for c in params["convs"]:
        x = conv1d_pallas(x, c["w"], c["b"], stride=c["s"], dilation=c["d"],
                          groups=c["g"], padding=c["p"], leaky_slope=0.2)
        f_r, f_g = x[:b_y], x[b_y:]
        fmap_r.append(jnp.tile(f_r, (2, 1, 1)) if b_y < b_y_hat else f_r)
        fmap_g.append(f_g)
    pc = params["proj"]
    x = conv1d_pallas(x, pc["w"], pc["b"], stride=pc["s"], dilation=pc["d"],
                      groups=pc["g"], padding=pc["p"])
    x_r, x_g = x[:b_y], x[b_y:]
    x_r = jnp.tile(x_r, (2, 1, 1)) if b_y < b_y_hat else x_r
    return x_r, x_g, fmap_r, fmap_g


def build_combd():
    pqmf_list = [make_pqmf(4, 192, 0.13, 10.0), make_pqmf(2, 256, 0.25, 10.0)]
    combd_h_u = [[16, 64, 256, 1024, 1024, 1024] for _ in range(3)]
    combd_d_k = [[7, 11, 11, 11, 11, 5], [11, 21, 21, 21, 21, 5],
                 [15, 41, 41, 41, 41, 5]]
    combd_d_s = [[1, 1, 4, 4, 4, 1] for _ in range(3)]
    combd_d_d = [[1, 1, 1, 1, 1, 1] for _ in range(3)]
    combd_d_g = [[1, 4, 16, 64, 256, 1] for _ in range(3)]
    combd_d_p = [[3, 5, 5, 5, 5, 2], [5, 10, 10, 10, 10, 2],
                 [7, 20, 20, 20, 20, 2]]
    combd_op_f, combd_op_k, combd_op_g = [1, 1, 1], [3, 3, 3], [1, 1, 1]
    blocks = []
    for a in zip(combd_h_u, combd_d_k, combd_d_s, combd_d_d, combd_d_g,
                 combd_d_p, combd_op_f, combd_op_k, combd_op_g):
        blocks.append(build_combd_block(*a))
    return {"pqmf": pqmf_list, "blocks": blocks}


def combd_forward(params, ys, ys_hat):
    # only band 0 of each PQMF is consumed here
    multi_scale_inputs_hat = [pqmf_analysis(pq, ys_hat[-1], num_bands=1)
                              for pq in params["pqmf"]]
    inputs_fake = [jnp.concatenate([y, multi_scale_inputs_hat[i]], axis=0)
                   if i != len(ys_hat) - 1 else y
                   for i, y in enumerate(ys_hat)]
    outs_real, outs_fake, f_maps_real, f_maps_fake = [], [], [], []
    for y, y_hat, blk in zip(ys, inputs_fake, params["blocks"]):
        b_y, b_y_hat = y.shape[0], y_hat.shape[0]
        cat_y = jnp.concatenate([y, y_hat], axis=0)
        o_r, o_g, f_r, f_g = combd_block_forward(blk, cat_y, b_y, b_y_hat)
        outs_real.append(o_r)
        outs_fake.append(o_g)
        f_maps_real.append(f_r)
        f_maps_fake.append(f_g)
    return outs_real, outs_fake, f_maps_real, f_maps_fake


# ----------------------------------------------------------------------------
# SBD
# ----------------------------------------------------------------------------
def build_mdc(cin, cout, strides, kernel_size, dilations):
    d_convs = []
    for _k, _d in zip(kernel_size, dilations):
        c = init_conv(cout, cin, _k)
        c.update(dict(d=_d, p=get_padding(_k, _d)))
        d_convs.append(c)
    post = init_conv(cout, cout, 3)
    post.update(dict(s=strides, p=get_padding(kernel_size[-1], dilations[-1])))
    return {"d_convs": d_convs, "post": post}


def mdc_forward(p, x):
    # all dilated branches fused into one kernel (shared input, summed output)
    branches = [dict(w=c["w"], b=c["b"], dilation=c["d"], padding=c["p"])
                for c in p["d_convs"]]
    x = grouped_conv_pallas(x, branches, stride=1, groups=1, leaky_slope=0.2)
    pc = p["post"]
    return conv1d_pallas(x, pc["w"], pc["b"], stride=pc["s"], padding=pc["p"],
                         leaky_slope=0.2)


def build_sbd_block(segment_dim, strides, filters, kernel_size, dilations):
    filters_in_out = [(segment_dim, filters[0])]
    for i in range(len(filters) - 1):
        filters_in_out.append((filters[i], filters[i + 1]))
    mdcs = []
    for _s, _f, _k, _d in zip(strides, filters_in_out, kernel_size, dilations):
        mdcs.append(build_mdc(_f[0], _f[1], _s, _k, _d))
    post = init_conv(1, filters_in_out[-1][1], 3)
    post.update(dict(s=1, p=3 // 2))
    return {"mdcs": mdcs, "post": post}


def sbd_block_forward(p, x):
    fmap_r, fmap_g = [], []
    for mdc in p["mdcs"]:
        x = mdc_forward(mdc, x)
        h = (x.shape[0] + 1) // 2  # torch.chunk(x, 2, dim=0)
        fmap_r.append(x[:h])
        fmap_g.append(x[h:])
    pc = p["post"]
    x = conv1d_pallas(x, pc["w"], pc["b"], stride=pc["s"], padding=pc["p"])
    h = (x.shape[0] + 1) // 2
    return x[:h], x[h:], fmap_r, fmap_g


def build_sbd():
    cfg = {
        "pqmf_params": [16, 256, 0.03, 10.0],
        "f_pqmf_params": [64, 256, 0.1, 9.0],
        "filters": [[64, 128, 256, 256, 256], [64, 128, 256, 256, 256],
                    [64, 128, 256, 256, 256], [32, 64, 128, 128, 128]],
        "kernel_sizes": [[[7] * 3] * 5, [[5] * 3] * 5, [[3] * 3] * 5,
                         [[5] * 3] * 5],
        "dilations": [[[5, 7, 11]] * 5, [[3, 5, 7]] * 5, [[1, 2, 3]] * 5,
                      [[1, 2, 3], [1, 2, 3], [1, 2, 3], [2, 3, 5], [2, 3, 5]]],
        "strides": [[1, 1, 3, 3, 1]] * 4,
        "band_ranges": [[0, 6], [0, 11], [0, 16], [0, 64]],
        "transpose": [False, False, False, True],
        "segment_size": 8192,
    }
    blocks = []
    for _f, _k, _d, _s, _br, _tr in zip(cfg["filters"], cfg["kernel_sizes"],
                                        cfg["dilations"], cfg["strides"],
                                        cfg["band_ranges"], cfg["transpose"]):
        if _tr:
            segment_dim = cfg["segment_size"] // _br[1] - _br[0]
        else:
            segment_dim = _br[1] - _br[0]
        blocks.append(build_sbd_block(segment_dim, _s, _f, _k, _d))
    return {"config": cfg,
            "pqmf": make_pqmf(*cfg["pqmf_params"]),
            "f_pqmf": make_pqmf(*cfg["f_pqmf_params"]),
            "blocks": blocks}


def sbd_forward(params, y, y_hat):
    cfg = params["config"]
    y_d_rs, y_d_gs, fmap_rs, fmap_gs = [], [], [], []
    # PQMF real+fake in one batched call; batch order [y, y_hat] matches the
    # per-block torch.cat([_y_in, _y_hat_in], dim=0).
    yy = jnp.concatenate([y, y_hat], axis=0)
    yy_in = pqmf_analysis(params["pqmf"], yy)
    yy_in_f = pqmf_analysis(params["f_pqmf"], yy)
    for blk, br, tr in zip(params["blocks"], cfg["band_ranges"],
                           cfg["transpose"]):
        if not tr:
            cat_y = yy_in[:, br[0]:br[1], :]
        else:
            cat_y = jnp.transpose(yy_in_f[:, br[0]:br[1], :], (0, 2, 1))
        y_d_r, y_d_g, fmap_r, fmap_g = sbd_block_forward(blk, cat_y)
        y_d_rs.append(y_d_r)
        fmap_rs.append(fmap_r)
        y_d_gs.append(y_d_g)
        fmap_gs.append(fmap_g)
    return y_d_rs, y_d_gs, fmap_rs, fmap_gs


# ----------------------------------------------------------------------------
# AvocodoDiscriminator
# ----------------------------------------------------------------------------
def build_avocodo():
    return {"combd": build_combd(), "sbd": build_sbd()}


def avocodo_forward(params, y, ys_hat):
    combd = params["combd"]
    ys = [pqmf_analysis(combd["pqmf"][0], y, num_bands=1),
          pqmf_analysis(combd["pqmf"][1], y, num_bands=1),
          y]
    y_c_rs, y_c_gs, fmap_c_rs, fmap_c_gs = combd_forward(combd, ys, ys_hat)
    y_s_rs, y_s_gs, fmap_s_rs, fmap_s_gs = sbd_forward(params["sbd"], y,
                                                       ys_hat[-1])
    y_c_rs.extend(y_s_rs)
    y_c_gs.extend(y_s_gs)
    fmap_c_rs.extend(fmap_s_rs)
    fmap_c_gs.extend(fmap_s_gs)
    return y_c_rs, y_c_gs, fmap_c_rs, fmap_c_gs


# ----------------------------------------------------------------------------
if __name__ == "__main__":
    # T must equal the SBD segment_size (8192) for the transposed sub-band
    # branch (in_channels = segment_size // 64); batch is kept small (1).
    B, T = 1, 8192
    key = jax.random.PRNGKey(0)
    k1, k2, k3, k4 = jax.random.split(key, 4)
    y = jax.random.normal(k1, (B, 1, T), jnp.float32) * 0.1
    ys_hat = [
        jax.random.normal(k2, (B, 1, T // 4), jnp.float32) * 0.1,
        jax.random.normal(k3, (B, 1, T // 2), jnp.float32) * 0.1,
        jax.random.normal(k4, (B, 1, T), jnp.float32) * 0.1,
    ]

    params = build_avocodo()
    out = avocodo_forward(params, y, ys_hat)
    jax.block_until_ready(out)
    print("KERNEL_OK")
</pallas_src>

<mosaic_0001>
module attributes {stable_mosaic.version = 11 : i64} {
  func.func @_gconv_kernel(%arg0: i32, %arg1: i32, %arg2: i32, %arg3: memref<1x1x196xf32, #tpu.memory_space<vmem>>, %arg4: memref<1x1x1xf32, #tpu.memory_space<vmem>>, %arg5: memref<1x1x196x2048xf32, #tpu.memory_space<vmem>>, %arg6: memref<1x1x1x2048xf32, #tpu.memory_space<vmem>>) attributes {dimension_semantics = [#tpu.dimension_semantics<parallel>, #tpu.dimension_semantics<parallel>, #tpu.dimension_semantics<parallel>], iteration_bounds = array<i64: 1, 1, 1>, scalar_prefetch = 0 : i64, scratch_operands = 0 : i64, tpu.core_type = #tpu.core_type<tc>, window_params = [{transform_indices = @transform_0, window_bounds = array<i64: 1, 1, 196>}, {transform_indices = @transform_1, window_bounds = array<i64: 1, 1, 1>}, {transform_indices = @transform_2, window_bounds = array<i64: 1, 1, 196, 2048>}, {transform_indices = @transform_3, window_bounds = array<i64: 1, 1, 1, 2048>}]} {
    %c0 = arith.constant 0 : index
    %c0_0 = arith.constant 0 : index
    %c0_1 = arith.constant 0 : index
    %c0_2 = arith.constant 0 : index
    %0 = vector.load %arg5[%c0, %c0_0, %c0_1, %c0_2] : memref<1x1x196x2048xf32, #tpu.memory_space<vmem>>, vector<1x1x196x2048xf32>
    %1 = vector.shape_cast %0 : vector<1x1x196x2048xf32> to vector<1x196x2048xf32>
    %c0_3 = arith.constant 0 : index
    %c0_4 = arith.constant 0 : index
    %c0_5 = arith.constant 0 : index
    %2 = vector.load %arg3[%c0_3, %c0_4, %c0_5] : memref<1x1x196xf32, #tpu.memory_space<vmem>>, vector<1x1x196xf32>
    %3 = vector.shape_cast %2 : vector<1x1x196xf32> to vector<1x196xf32>
    %4 = vector.shape_cast %1 : vector<1x196x2048xf32> to vector<196x2048xf32>
    %cst = arith.constant dense<0.000000e+00> : vector<1x2048xf32>
    %5 = tpu.matmul %3, %4, %cst {dimension_numbers = #tpu.dot_dimension_numbers<[1], [0], [0], [1], [0, 0, 1, 1], [], []>} : vector<1x196xf32>, vector<196x2048xf32>, vector<1x2048xf32> -> vector<1x2048xf32>
    %6 = vector.shape_cast %5 : vector<1x2048xf32> to vector<1x1x2048xf32>
    %c0_6 = arith.constant 0 : index
    %c0_7 = arith.constant 0 : index
    %c0_8 = arith.constant 0 : index
    %7 = vector.load %arg4[%c0_6, %c0_7, %c0_8] : memref<1x1x1xf32, #tpu.memory_space<vmem>>, vector<1x1x1xf32>
    %8 = vector.broadcast %7 : vector<1x1x1xf32> to vector<1x1x2048xf32>
    %9 = arith.addf %6, %8 : vector<1x1x2048xf32>
    %c0_9 = arith.constant 0 : index
    %c0_10 = arith.constant 0 : index
    %c0_11 = arith.constant 0 : index
    %c0_12 = arith.constant 0 : index
    %10 = vector.load %arg6[%c0_9, %c0_10, %c0_11, %c0_12] : memref<1x1x1x2048xf32, #tpu.memory_space<vmem>>, vector<1x1x1x2048xf32>
    %11 = vector.shape_cast %10 : vector<1x1x1x2048xf32> to vector<1x1x2048xf32>
    %12 = vector.shape_cast %9 : vector<1x1x2048xf32> to vector<1x1x1x2048xf32>
    tpu.vector_store %arg6[%c0_9, %c0_10, %c0_11, %c0_12], %12 {strides = array<i32>} : memref<1x1x1x2048xf32, #tpu.memory_space<vmem>>, vector<1x1x1x2048xf32>,
    return
  }
  func.func @transform_0(%arg0: i32, %arg1: i32, %arg2: i32) -> (i32, i32, i32) {
    %c0_i32 = arith.constant 0 : i32
    %c0_i32_0 = arith.constant 0 : i32
    return %arg0, %arg1, %c0_i32 : i32, i32, i32
  }
  func.func @transform_1(%arg0: i32, %arg1: i32, %arg2: i32) -> (i32, i32, i32) {
    %c0_i32 = arith.constant 0 : i32
    %c0_i32_0 = arith.constant 0 : i32
    return %arg0, %arg1, %c0_i32 : i32, i32, i32
  }
  func.func @transform_2(%arg0: i32, %arg1: i32, %arg2: i32) -> (i32, i32, i32, i32) {
    %c0_i32 = arith.constant 0 : i32
    %c0_i32_0 = arith.constant 0 : i32
    %c0_i32_1 = arith.constant 0 : i32
    return %arg2, %arg0, %c0_i32, %c0_i32_0 : i32, i32, i32, i32
  }
  func.func @transform_3(%arg0: i32, %arg1: i32, %arg2: i32) -> (i32, i32, i32, i32) {
    %c0_i32 = arith.constant 0 : i32
    %c0_i32_0 = arith.constant 0 : i32
    return %arg2, %arg0, %arg1, %c0_i32 : i32, i32, i32, i32
  }
}

</mosaic_0001>

<llo_original>
// kernel: tpu_custom_call.1
$region0: #{tpu_custom_call.1}
  #allocation0 [shape = 'u32[]', space=smem, size = 0x4, offset = 0x4, fixed_abs, tag = 'smem constant byte address 0x4 - core index']
  #allocation1 [shape = 'u32[72,128]{1,0:T(1,128)}', space=vmem, size = 0x9000, scoped, tag = 'internal scratch']
  #allocation2 [shape = 'f32[1,1,1]{2,1,0:T(1,128)S(1)}', space=vmem, size = 0x200, scoped, tag = 'scoped memory for tpu_custom_call.1']
  %s0 = inlined_call_operand.vmem [shape: f32[1,1,196], index: 0, kind: input, shape index: {}]
  %s1 = inlined_call_operand.<no memory space> [shape: f32[1,1,1], index: 1, kind: input, shape index: {}]
  %s2 = inlined_call_operand.vmem [shape: f32[1,1,196,2048], index: 2, kind: input, shape index: {}]
  %s3 = inlined_call_operand.hbm [shape: f32[1,1,1,2048], index: 3, kind: output, shape index: {}]
  %s4 = sld [smem:[#allocation0]]
  $region22: #{tpu_custom_call.1} parent=0
    _
  %s6 = ssub.s32 1, %s4
  %s7 = scalar_select 0, %s6, %s4
  %v8 = vstv %s1
  %9 = vst [vmem:[#allocation2] sm:$0x1] %v8
  $region1: #{tpu_custom_call.1} parent=0
    #allocation3 [shape = 'u8[8192]{0}', space=vmem, size = 0x2000, scoped, tag = 'output window, operand 0, single buffered']
    #allocation4 [shape = 's32[1]{0}', space=sflag, size = 0x4, scoped, tag = 'scoped memory for tpu_custom_call.1']
    %10 = vsyncpa [#allocation4], 0
    // Predicated region
    $region2: #{tpu_custom_call.1} parent=1 // pred_check
      _
    $region3: #{tpu_custom_call.1} parent=1 // pred_check_branch
      %12 = sbr.rel (0) target = $region5
    $region4: #{tpu_custom_call.1} parent=1 // pred_region
      _
    $region5: #{tpu_custom_call.1} parent=1 // pred_fallthru
      _
    // Predicated region
    $region6: #{tpu_custom_call.1} parent=1 // pred_check
      _
    $region7: #{tpu_custom_call.1} parent=1 // pred_check_branch
      %14 = sbr.rel (0) target = $region9
    $region8: #{tpu_custom_call.1} parent=1 // pred_region
      _
    $region9: #{tpu_custom_call.1} parent=1 // pred_fallthru
      _
    // Predicated region
    $region10: #{tpu_custom_call.1} parent=1 // pred_check
      _
    $region11: #{tpu_custom_call.1} parent=1 // pred_check_branch
      %16 = sbr.rel (0) target = $region13
    $region12: #{tpu_custom_call.1} parent=1 // pred_region
      _
    $region13: #{tpu_custom_call.1} parent=1 // pred_fallthru
      _
    %v17 = vld [vmem:[%s2] sm:$0xff]
    %v18 = vld [vmem:[%s2 + $0x8] sm:$0xff]
    %v19 = vld [vmem:[%s2 + $0x10] sm:$0xff]
    %v20 = vld [vmem:[%s2 + $0x18] sm:$0xff]
    %v21 = vld [vmem:[%s2 + $0x20] sm:$0xff]
    %v22 = vld [vmem:[%s2 + $0x28] sm:$0xff]
    %v23 = vld [vmem:[%s2 + $0x30] sm:$0xff]
    %v24 = vld [vmem:[%s2 + $0x38] sm:$0xff]
    %v25 = vld [vmem:[%s2 + $0x40] sm:$0xff]
    %v26 = vld [vmem:[%s2 + $0x48] sm:$0xff]
    %v27 = vld [vmem:[%s2 + $0x50] sm:$0xff]
    %v28 = vld [vmem:[%s2 + $0x58] sm:$0xff]
    %v29 = vld [vmem:[%s2 + $0x60] sm:$0xff]
    %v30 = vld [vmem:[%s2 + $0x68] sm:$0xff]
    %v31 = vld [vmem:[%s2 + $0x70] sm:$0xff]
    %v32 = vld [vmem:[%s2 + $0x78] sm:$0xff]
    %v33 = vld [vmem:[%s2 + $0x80] sm:$0xff]
    %v34 = vld [vmem:[%s2 + $0x88] sm:$0xff]
    %v35 = vld [vmem:[%s2 + $0x90] sm:$0xff]
    %v36 = vld [vmem:[%s2 + $0x98] sm:$0xff]
    %v37 = vld [vmem:[%s2 + $0xa0] sm:$0xff]
    %v38 = vld [vmem:[%s2 + $0xa8] sm:$0xff]
    %v39 = vld [vmem:[%s2 + $0xb0] sm:$0xff]
    %v40 = vld [vmem:[%s2 + $0xb8] sm:$0xff]
    %v41 = vld [vmem:[%s2 + $0xc0] sm:$0xff]
    %v42 = vld [vmem:[%s2 + $0xc8] sm:$0xff]
    %v43 = vld [vmem:[%s2 + $0xd0] sm:$0xff]
    %v44 = vld [vmem:[%s2 + $0xd8] sm:$0xff]
    %v45 = vld [vmem:[%s2 + $0xe0] sm:$0xff]
    %v46 = vld [vmem:[%s2 + $0xe8] sm:$0xff]
    %v47 = vld [vmem:[%s2 + $0xf0] sm:$0xff]
    %v48 = vld [vmem:[%s2 + $0xf8] sm:$0xff]
    %v49 = vld [vmem:[%s2 + $0x100] sm:$0xff]
    %v50 = vld [vmem:[%s2 + $0x108] sm:$0xff]
    %v51 = vld [vmem:[%s2 + $0x110] sm:$0xff]
    %v52 = vld [vmem:[%s2 + $0x118] sm:$0xff]
    %v53 = vld [vmem:[%s2 + $0x120] sm:$0xff]
    %v54 = vld [vmem:[%s2 + $0x128] sm:$0xff]
    %v55 = vld [vmem:[%s2 + $0x130] sm:$0xff]
    %v56 = vld [vmem:[%s2 + $0x138] sm:$0xff]
    %v57 = vld [vmem:[%s2 + $0x140] sm:$0xff]
    %v58 = vld [vmem:[%s2 + $0x148] sm:$0xff]
    %v59 = vld [vmem:[%s2 + $0x150] sm:$0xff]
    %v60 = vld [vmem:[%s2 + $0x158] sm:$0xff]
    %v61 = vld [vmem:[%s2 + $0x160] sm:$0xff]
    %v62 = vld [vmem:[%s2 + $0x168] sm:$0xff]
    %v63 = vld [vmem:[%s2 + $0x170] sm:$0xff]
    %v64 = vld [vmem:[%s2 + $0x178] sm:$0xff]
    %v65 = vld [vmem:[%s2 + $0x180] sm:$0xff]
    %v66 = vld [vmem:[%s2 + $0x188] sm:$0xff]
    %v67 = vld [vmem:[%s2 + $0x190] sm:$0xff]
    %v68 = vld [vmem:[%s2 + $0x198] sm:$0xff]
    %v69 = vld [vmem:[%s2 + $0x1a0] sm:$0xff]
    %v70 = vld [vmem:[%s2 + $0x1a8] sm:$0xff]
    %v71 = vld [vmem:[%s2 + $0x1b0] sm:$0xff]
    %v72 = vld [vmem:[%s2 + $0x1b8] sm:$0xff]
    %v73 = vld [vmem:[%s2 + $0x1c0] sm:$0xff]
    %v74 = vld [vmem:[%s2 + $0x1c8] sm:$0xff]
    %v75 = vld [vmem:[%s2 + $0x1d0] sm:$0xff]
    %v76 = vld [vmem:[%s2 + $0x1d8] sm:$0xff]
    %v77 = vld [vmem:[%s2 + $0x1e0] sm:$0xff]
    %v78 = vld [vmem:[%s2 + $0x1e8] sm:$0xff]
    %v79 = vld [vmem:[%s2 + $0x1f0] sm:$0xff]
    %v80 = vld [vmem:[%s2 + $0x1f8] sm:$0xff]
    %v81 = vld [vmem:[%s2 + $0x200] sm:$0xff]
    %v82 = vld [vmem:[%s2 + $0x208] sm:$0xff]
    %v83 = vld [vmem:[%s2 + $0x210] sm:$0xff]
    %v84 = vld [vmem:[%s2 + $0x218] sm:$0xff]
    %v85 = vld [vmem:[%s2 + $0x220] sm:$0xff]
    %v86 = vld [vmem:[%s2 + $0x228] sm:$0xff]
    %v87 = vld [vmem:[%s2 + $0x230] sm:$0xff]
    %v88 = vld [vmem:[%s2 + $0x238] sm:$0xff]
    %v89 = vld [vmem:[%s2 + $0x240] sm:$0xff]
    %v90 = vld [vmem:[%s2 + $0x248] sm:$0xff]
    %v91 = vld [vmem:[%s2 + $0x250] sm:$0xff]
    %v92 = vld [vmem:[%s2 + $0x258] sm:$0xff]
    %v93 = vld [vmem:[%s2 + $0x260] sm:$0xff]
    %v94 = vld [vmem:[%s2 + $0x268] sm:$0xff]
    %v95 = vld [vmem:[%s2 + $0x270] sm:$0xff]
    %v96 = vld [vmem:[%s2 + $0x278] sm:$0xff]
    %v97 = vld [vmem:[%s2 + $0x280] sm:$0xff]
    %v98 = vld [vmem:[%s2 + $0x288] sm:$0xff]
    %v99 = vld [vmem:[%s2 + $0x290] sm:$0xff]
    %v100 = vld [vmem:[%s2 + $0x298] sm:$0xff]
    %v101 = vld [vmem:[%s2 + $0x2a0] sm:$0xff]
    %v102 = vld [vmem:[%s2 + $0x2a8] sm:$0xff]
    %v103 = vld [vmem:[%s2 + $0x2b0] sm:$0xff]
    %v104 = vld [vmem:[%s2 + $0x2b8] sm:$0xff]
    %v105 = vld [vmem:[%s2 + $0x2c0] sm:$0xff]
    %v106 = vld [vmem:[%s2 + $0x2c8] sm:$0xff]
    %v107 = vld [vmem:[%s2 + $0x2d0] sm:$0xff]
    %v108 = vld [vmem:[%s2 + $0x2d8] sm:$0xff]
    %v109 = vld [vmem:[%s2 + $0x2e0] sm:$0xff]
    %v110 = vld [vmem:[%s2 + $0x2e8] sm:$0xff]
    %v111 = vld [vmem:[%s2 + $0x2f0] sm:$0xff]
    %v112 = vld [vmem:[%s2 + $0x2f8] sm:$0xff]
    %v113 = vld [vmem:[%s2 + $0x300] sm:$0xff]
    %v114 = vld [vmem:[%s2 + $0x308] sm:$0xff]
    %v115 = vld [vmem:[%s2 + $0x310] sm:$0xff]
    %v116 = vld [vmem:[%s2 + $0x318] sm:$0xff]
    %v117 = vld [vmem:[%s2 + $0x320] sm:$0xff]
    %v118 = vld [vmem:[%s2 + $0x328] sm:$0xff]
    %v119 = vld [vmem:[%s2 + $0x330] sm:$0xff]
    %v120 = vld [vmem:[%s2 + $0x338] sm:$0xff]
    %v121 = vld [vmem:[%s2 + $0x340] sm:$0xff]
    %v122 = vld [vmem:[%s2 + $0x348] sm:$0xff]
    %v123 = vld [vmem:[%s2 + $0x350] sm:$0xff]
    %v124 = vld [vmem:[%s2 + $0x358] sm:$0xff]
    %v125 = vld [vmem:[%s2 + $0x360] sm:$0xff]
    %v126 = vld [vmem:[%s2 + $0x368] sm:$0xff]
    %v127 = vld [vmem:[%s2 + $0x370] sm:$0xff]
    %v128 = vld [vmem:[%s2 + $0x378] sm:$0xff]
    %v129 = vld [vmem:[%s2 + $0x380] sm:$0xff]
    %v130 = vld [vmem:[%s2 + $0x388] sm:$0xff]
    %v131 = vld [vmem:[%s2 + $0x390] sm:$0xff]
    %v132 = vld [vmem:[%s2 + $0x398] sm:$0xff]
    %v133 = vld [vmem:[%s2 + $0x3a0] sm:$0xff]
    %v134 = vld [vmem:[%s2 + $0x3a8] sm:$0xff]
    %v135 = vld [vmem:[%s2 + $0x3b0] sm:$0xff]
    %v136 = vld [vmem:[%s2 + $0x3b8] sm:$0xff]
    %v137 = vld [vmem:[%s2 + $0x3c0] sm:$0xff]
    %v138 = vld [vmem:[%s2 + $0x3c8] sm:$0xff]
    %v139 = vld [vmem:[%s2 + $0x3d0] sm:$0xff]
    %v140 = vld [vmem:[%s2 + $0x3d8] sm:$0xff]
    %v141 = vld [vmem:[%s2 + $0x3e0] sm:$0xff]
    %v142 = vld [vmem:[%s2 + $0x3e8] sm:$0xff]
    %v143 = vld [vmem:[%s2 + $0x3f0] sm:$0xff]
    %v144 = vld [vmem:[%s2 + $0x3f8] sm:$0xff]
    %v145 = vld [vmem:[%s2 + $0x400] sm:$0xff]
    %v146 = vld [vmem:[%s2 + $0x408] sm:$0xff]
    %v147 = vld [vmem:[%s2 + $0x410] sm:$0xff]
    %v148 = vld [vmem:[%s2 + $0x418] sm:$0xff]
    %v149 = vld [vmem:[%s2 + $0x420] sm:$0xff]
    %v150 = vld [vmem:[%s2 + $0x428] sm:$0xff]
    %v151 = vld [vmem:[%s2 + $0x430] sm:$0xff]
    %v152 = vld [vmem:[%s2 + $0x438] sm:$0xff]
    %v153 = vld [vmem:[%s2 + $0x440] sm:$0xff]
    %v154 = vld [vmem:[%s2 + $0x448] sm:$0xff]
    %v155 = vld [vmem:[%s2 + $0x450] sm:$0xff]
    %v156 = vld [vmem:[%s2 + $0x458] sm:$0xff]
    %v157 = vld [vmem:[%s2 + $0x460] sm:$0xff]
    %v158 = vld [vmem:[%s2 + $0x468] sm:$0xff]
    %v159 = vld [vmem:[%s2 + $0x470] sm:$0xff]
    %v160 = vld [vmem:[%s2 + $0x478] sm:$0xff]
    %v161 = vld [vmem:[%s2 + $0x480] sm:$0xff]
    %v162 = vld [vmem:[%s2 + $0x488] sm:$0xff]
    %v163 = vld [vmem:[%s2 + $0x490] sm:$0xff]
    %v164 = vld [vmem:[%s2 + $0x498] sm:$0xff]
    %v165 = vld [vmem:[%s2 + $0x4a0] sm:$0xff]
    %v166 = vld [vmem:[%s2 + $0x4a8] sm:$0xff]
    %v167 = vld [vmem:[%s2 + $0x4b0] sm:$0xff]
    %v168 = vld [vmem:[%s2 + $0x4b8] sm:$0xff]
    %v169 = vld [vmem:[%s2 + $0x4c0] sm:$0xff]
    %v170 = vld [vmem:[%s2 + $0x4c8] sm:$0xff]
    %v171 = vld [vmem:[%s2 + $0x4d0] sm:$0xff]
    %v172 = vld [vmem:[%s2 + $0x4d8] sm:$0xff]
    %v173 = vld [vmem:[%s2 + $0x4e0] sm:$0xff]
    %v174 = vld [vmem:[%s2 + $0x4e8] sm:$0xff]
    %v175 = vld [vmem:[%s2 + $0x4f0] sm:$0xff]
    %v176 = vld [vmem:[%s2 + $0x4f8] sm:$0xff]
    %v177 = vld [vmem:[%s2 + $0x500] sm:$0xff]
    %v178 = vld [vmem:[%s2 + $0x508] sm:$0xff]
    %v179 = vld [vmem:[%s2 + $0x510] sm:$0xff]
    %v180 = vld [vmem:[%s2 + $0x518] sm:$0xff]
    %v181 = vld [vmem:[%s2 + $0x520] sm:$0xff]
    %v182 = vld [vmem:[%s2 + $0x528] sm:$0xff]
    %v183 = vld [vmem:[%s2 + $0x530] sm:$0xff]
    %v184 = vld [vmem:[%s2 + $0x538] sm:$0xff]
    %v185 = vld [vmem:[%s2 + $0x540] sm:$0xff]
    %v186 = vld [vmem:[%s2 + $0x548] sm:$0xff]
    %v187 = vld [vmem:[%s2 + $0x550] sm:$0xff]
    %v188 = vld [vmem:[%s2 + $0x558] sm:$0xff]
    %v189 = vld [vmem:[%s2 + $0x560] sm:$0xff]
    %v190 = vld [vmem:[%s2 + $0x568] sm:$0xff]
    %v191 = vld [vmem:[%s2 + $0x570] sm:$0xff]
    %v192 = vld [vmem:[%s2 + $0x578] sm:$0xff]
    %v193 = vld [vmem:[%s2 + $0x580] sm:$0xff]
    %v194 = vld [vmem:[%s2 + $0x588] sm:$0xff]
    %v195 = vld [vmem:[%s2 + $0x590] sm:$0xff]
    %v196 = vld [vmem:[%s2 + $0x598] sm:$0xff]
    %v197 = vld [vmem:[%s2 + $0x5a0] sm:$0xff]
    %v198 = vld [vmem:[%s2 + $0x5a8] sm:$0xff]
    %v199 = vld [vmem:[%s2 + $0x5b0] sm:$0xff]
    %v200 = vld [vmem:[%s2 + $0x5b8] sm:$0xff]
    %v201 = vld [vmem:[%s2 + $0x5c0] sm:$0xff]
    %v202 = vld [vmem:[%s2 + $0x5c8] sm:$0xff]
    %v203 = vld [vmem:[%s2 + $0x5d0] sm:$0xff]
    %v204 = vld [vmem:[%s2 + $0x5d8] sm:$0xff]
    %v205 = vld [vmem:[%s2 + $0x5e0] sm:$0xff]
    %v206 = vld [vmem:[%s2 + $0x5e8] sm:$0xff]
    %v207 = vld [vmem:[%s2 + $0x5f0] sm:$0xff]
    %v208 = vld [vmem:[%s2 + $0x5f8] sm:$0xff]
    %v209 = vld [vmem:[%s2 + $0x600] sm:$0xff]
    %v210 = vld [vmem:[%s2 + $0x608] sm:$0xff]
    %v211 = vld [vmem:[%s2 + $0x610] sm:$0xff]
    %v212 = vld [vmem:[%s2 + $0x618] sm:$0xff]
    %v213 = vld [vmem:[%s2 + $0x620] sm:$0xff]
    %v214 = vld [vmem:[%s2 + $0x628] sm:$0xff]
    %v215 = vld [vmem:[%s2 + $0x630] sm:$0xff]
    %v216 = vld [vmem:[%s2 + $0x638] sm:$0xff]
    %v217 = vld [vmem:[%s2 + $0x640] sm:$0xff]
    %v218 = vld [vmem:[%s2 + $0x648] sm:$0xff]
    %v219 = vld [vmem:[%s2 + $0x650] sm:$0xff]
    %v220 = vld [vmem:[%s2 + $0x658] sm:$0xff]
    %v221 = vld [vmem:[%s2 + $0x660] sm:$0xff]
    %v222 = vld [vmem:[%s2 + $0x668] sm:$0xff]
    %v223 = vld [vmem:[%s2 + $0x670] sm:$0xff]
    %v224 = vld [vmem:[%s2 + $0x678] sm:$0xff]
    %v225 = vld [vmem:[%s2 + $0x680] sm:$0xff]
    %v226 = vld [vmem:[%s2 + $0x688] sm:$0xff]
    %v227 = vld [vmem:[%s2 + $0x690] sm:$0xff]
    %v228 = vld [vmem:[%s2 + $0x698] sm:$0xff]
    %v229 = vld [vmem:[%s2 + $0x6a0] sm:$0xff]
    %v230 = vld [vmem:[%s2 + $0x6a8] sm:$0xff]
    %v231 = vld [vmem:[%s2 + $0x6b0] sm:$0xff]
    %v232 = vld [vmem:[%s2 + $0x6b8] sm:$0xff]
    %v233 = vld [vmem:[%s2 + $0x6c0] sm:$0xff]
    %v234 = vld [vmem:[%s2 + $0x6c8] sm:$0xff]
    %v235 = vld [vmem:[%s2 + $0x6d0] sm:$0xff]
    %v236 = vld [vmem:[%s2 + $0x6d8] sm:$0xff]
    %v237 = vld [vmem:[%s2 + $0x6e0] sm:$0xff]
    %v238 = vld [vmem:[%s2 + $0x6e8] sm:$0xff]
    %v239 = vld [vmem:[%s2 + $0x6f0] sm:$0xff]
    %v240 = vld [vmem:[%s2 + $0x6f8] sm:$0xff]
    %v241 = vld [vmem:[%s2 + $0x700] sm:$0xff]
    %v242 = vld [vmem:[%s2 + $0x708] sm:$0xff]
    %v243 = vld [vmem:[%s2 + $0x710] sm:$0xff]
    %v244 = vld [vmem:[%s2 + $0x718] sm:$0xff]
    %v245 = vld [vmem:[%s2 + $0x720] sm:$0xff]
    %v246 = vld [vmem:[%s2 + $0x728] sm:$0xff]
    %v247 = vld [vmem:[%s2 + $0x730] sm:$0xff]
    %v248 = vld [vmem:[%s2 + $0x738] sm:$0xff]
    %v249 = vld [vmem:[%s2 + $0x740] sm:$0xff]
    %v250 = vld [vmem:[%s2 + $0x748] sm:$0xff]
    %v251 = vld [vmem:[%s2 + $0x750] sm:$0xff]
    %v252 = vld [vmem:[%s2 + $0x758] sm:$0xff]
    %v253 = vld [vmem:[%s2 + $0x760] sm:$0xff]
    %v254 = vld [vmem:[%s2 + $0x768] sm:$0xff]
    %v255 = vld [vmem:[%s2 + $0x770] sm:$0xff]
    %v256 = vld [vmem:[%s2 + $0x778] sm:$0xff]
    %v257 = vld [vmem:[%s2 + $0x780] sm:$0xff]
    %v258 = vld [vmem:[%s2 + $0x788] sm:$0xff]
    %v259 = vld [vmem:[%s2 + $0x790] sm:$0xff]
    %v260 = vld [vmem:[%s2 + $0x798] sm:$0xff]
    %v261 = vld [vmem:[%s2 + $0x7a0] sm:$0xff]
    %v262 = vld [vmem:[%s2 + $0x7a8] sm:$0xff]
    %v263 = vld [vmem:[%s2 + $0x7b0] sm:$0xff]
    %v264 = vld [vmem:[%s2 + $0x7b8] sm:$0xff]
    %v265 = vld [vmem:[%s2 + $0x7c0] sm:$0xff]
    %v266 = vld [vmem:[%s2 + $0x7c8] sm:$0xff]
    %v267 = vld [vmem:[%s2 + $0x7d0] sm:$0xff]
    %v268 = vld [vmem:[%s2 + $0x7d8] sm:$0xff]
    %v269 = vld [vmem:[%s2 + $0x7e0] sm:$0xff]
    %v270 = vld [vmem:[%s2 + $0x7e8] sm:$0xff]
    %v271 = vld [vmem:[%s2 + $0x7f0] sm:$0xff]
    %v272 = vld [vmem:[%s2 + $0x7f8] sm:$0xff]
    %v273 = vld [vmem:[%s2 + $0x800] sm:$0xff]
    %v274 = vld [vmem:[%s2 + $0x808] sm:$0xff]
    %v275 = vld [vmem:[%s2 + $0x810] sm:$0xff]
    %v276 = vld [vmem:[%s2 + $0x818] sm:$0xff]
    %v277 = vld [vmem:[%s2 + $0x820] sm:$0xff]
    %v278 = vld [vmem:[%s2 + $0x828] sm:$0xff]
    %v279 = vld [vmem:[%s2 + $0x830] sm:$0xff]
    %v280 = vld [vmem:[%s2 + $0x838] sm:$0xff]
    %v281 = vld [vmem:[%s2 + $0x840] sm:$0xff]
    %v282 = vld [vmem:[%s2 + $0x848] sm:$0xff]
    %v283 = vld [vmem:[%s2 + $0x850] sm:$0xff]
    %v284 = vld [vmem:[%s2 + $0x858] sm:$0xff]
    %v285 = vld [vmem:[%s2 + $0x860] sm:$0xff]
    %v286 = vld [vmem:[%s2 + $0x868] sm:$0xff]
    %v287 = vld [vmem:[%s2 + $0x870] sm:$0xff]
    %v288 = vld [vmem:[%s2 + $0x878] sm:$0xff]
    %v289 = vld [vmem:[%s2 + $0x880] sm:$0xff]
    %v290 = vld [vmem:[%s2 + $0x888] sm:$0xff]
    %v291 = vld [vmem:[%s2 + $0x890] sm:$0xff]
    %v292 = vld [vmem:[%s2 + $0x898] sm:$0xff]
    %v293 = vld [vmem:[%s2 + $0x8a0] sm:$0xff]
    %v294 = vld [vmem:[%s2 + $0x8a8] sm:$0xff]
    %v295 = vld [vmem:[%s2 + $0x8b0] sm:$0xff]
    %v296 = vld [vmem:[%s2 + $0x8b8] sm:$0xff]
    %v297 = vld [vmem:[%s2 + $0x8c0] sm:$0xff]
    %v298 = vld [vmem:[%s2 + $0x8c8] sm:$0xff]
    %v299 = vld [vmem:[%s2 + $0x8d0] sm:$0xff]
    %v300 = vld [vmem:[%s2 + $0x8d8] sm:$0xff]
    %v301 = vld [vmem:[%s2 + $0x8e0] sm:$0xff]
    %v302 = vld [vmem:[%s2 + $0x8e8] sm:$0xff]
    %v303 = vld [vmem:[%s2 + $0x8f0] sm:$0xff]
    %v304 = vld [vmem:[%s2 + $0x8f8] sm:$0xff]
    %v305 = vld [vmem:[%s2 + $0x900] sm:$0xff]
    %v306 = vld [vmem:[%s2 + $0x908] sm:$0xff]
    %v307 = vld [vmem:[%s2 + $0x910] sm:$0xff]
    %v308 = vld [vmem:[%s2 + $0x918] sm:$0xff]
    %v309 = vld [vmem:[%s2 + $0x920] sm:$0xff]
    %v310 = vld [vmem:[%s2 + $0x928] sm:$0xff]
    %v311 = vld [vmem:[%s2 + $0x930] sm:$0xff]
    %v312 = vld [vmem:[%s2 + $0x938] sm:$0xff]
    %v313 = vld [vmem:[%s2 + $0x940] sm:$0xff]
    %v314 = vld [vmem:[%s2 + $0x948] sm:$0xff]
    %v315 = vld [vmem:[%s2 + $0x950] sm:$0xff]
    %v316 = vld [vmem:[%s2 + $0x958] sm:$0xff]
    %v317 = vld [vmem:[%s2 + $0x960] sm:$0xff]
    %v318 = vld [vmem:[%s2 + $0x968] sm:$0xff]
    %v319 = vld [vmem:[%s2 + $0x970] sm:$0xff]
    %v320 = vld [vmem:[%s2 + $0x978] sm:$0xff]
    %v321 = vld [vmem:[%s2 + $0x980] sm:$0xff]
    %v322 = vld [vmem:[%s2 + $0x988] sm:$0xff]
    %v323 = vld [vmem:[%s2 + $0x990] sm:$0xff]
    %v324 = vld [vmem:[%s2 + $0x998] sm:$0xff]
    %v325 = vld [vmem:[%s2 + $0x9a0] sm:$0xff]
    %v326 = vld [vmem:[%s2 + $0x9a8] sm:$0xff]
    %v327 = vld [vmem:[%s2 + $0x9b0] sm:$0xff]
    %v328 = vld [vmem:[%s2 + $0x9b8] sm:$0xff]
    %v329 = vld [vmem:[%s2 + $0x9c0] sm:$0xff]
    %v330 = vld [vmem:[%s2 + $0x9c8] sm:$0xff]
    %v331 = vld [vmem:[%s2 + $0x9d0] sm:$0xff]
    %v332 = vld [vmem:[%s2 + $0x9d8] sm:$0xff]
    %v333 = vld [vmem:[%s2 + $0x9e0] sm:$0xff]
    %v334 = vld [vmem:[%s2 + $0x9e8] sm:$0xff]
    %v335 = vld [vmem:[%s2 + $0x9f0] sm:$0xff]
    %v336 = vld [vmem:[%s2 + $0x9f8] sm:$0xff]
    %v337 = vld [vmem:[%s2 + $0xa00] sm:$0xff]
    %v338 = vld [vmem:[%s2 + $0xa08] sm:$0xff]
    %v339 = vld [vmem:[%s2 + $0xa10] sm:$0xff]
    %v340 = vld [vmem:[%s2 + $0xa18] sm:$0xff]
    %v341 = vld [vmem:[%s2 + $0xa20] sm:$0xff]
    %v342 = vld [vmem:[%s2 + $0xa28] sm:$0xff]
    %v343 = vld [vmem:[%s2 + $0xa30] sm:$0xff]
    %v344 = vld [vmem:[%s2 + $0xa38] sm:$0xff]
    %v345 = vld [vmem:[%s2 + $0xa40] sm:$0xff]
    %v346 = vld [vmem:[%s2 + $0xa48] sm:$0xff]
    %v347 = vld [vmem:[%s2 + $0xa50] sm:$0xff]
    %v348 = vld [vmem:[%s2 + $0xa58] sm:$0xff]
    %v349 = vld [vmem:[%s2 + $0xa60] sm:$0xff]
    %v350 = vld [vmem:[%s2 + $0xa68] sm:$0xff]
    %v351 = vld [vmem:[%s2 + $0xa70] sm:$0xff]
    %v352 = vld [vmem:[%s2 + $0xa78] sm:$0xff]
    %v353 = vld [vmem:[%s2 + $0xa80] sm:$0xff]
    %v354 = vld [vmem:[%s2 + $0xa88] sm:$0xff]
    %v355 = vld [vmem:[%s2 + $0xa90] sm:$0xff]
    %v356 = vld [vmem:[%s2 + $0xa98] sm:$0xff]
    %v357 = vld [vmem:[%s2 + $0xaa0] sm:$0xff]
    %v358 = vld [vmem:[%s2 + $0xaa8] sm:$0xff]
    %v359 = vld [vmem:[%s2 + $0xab0] sm:$0xff]
    %v360 = vld [vmem:[%s2 + $0xab8] sm:$0xff]
    %v361 = vld [vmem:[%s2 + $0xac0] sm:$0xff]
    %v362 = vld [vmem:[%s2 + $0xac8] sm:$0xff]
    %v363 = vld [vmem:[%s2 + $0xad0] sm:$0xff]
    %v364 = vld [vmem:[%s2 + $0xad8] sm:$0xff]
    %v365 = vld [vmem:[%s2 + $0xae0] sm:$0xff]
    %v366 = vld [vmem:[%s2 + $0xae8] sm:$0xff]
    %v367 = vld [vmem:[%s2 + $0xaf0] sm:$0xff]
    %v368 = vld [vmem:[%s2 + $0xaf8] sm:$0xff]
    %v369 = vld [vmem:[%s2 + $0xb00] sm:$0xff]
    %v370 = vld [vmem:[%s2 + $0xb08] sm:$0xff]
    %v371 = vld [vmem:[%s2 + $0xb10] sm:$0xff]
    %v372 = vld [vmem:[%s2 + $0xb18] sm:$0xff]
    %v373 = vld [vmem:[%s2 + $0xb20] sm:$0xff]
    %v374 = vld [vmem:[%s2 + $0xb28] sm:$0xff]
    %v375 = vld [vmem:[%s2 + $0xb30] sm:$0xff]
    %v376 = vld [vmem:[%s2 + $0xb38] sm:$0xff]
    %v377 = vld [vmem:[%s2 + $0xb40] sm:$0xff]
    %v378 = vld [vmem:[%s2 + $0xb48] sm:$0xff]
    %v379 = vld [vmem:[%s2 + $0xb50] sm:$0xff]
    %v380 = vld [vmem:[%s2 + $0xb58] sm:$0xff]
    %v381 = vld [vmem:[%s2 + $0xb60] sm:$0xff]
    %v382 = vld [vmem:[%s2 + $0xb68] sm:$0xff]
    %v383 = vld [vmem:[%s2 + $0xb70] sm:$0xff]
    %v384 = vld [vmem:[%s2 + $0xb78] sm:$0xff]
    %v385 = vld [vmem:[%s2 + $0xb80] sm:$0xff]
    %v386 = vld [vmem:[%s2 + $0xb88] sm:$0xff]
    %v387 = vld [vmem:[%s2 + $0xb90] sm:$0xff]
    %v388 = vld [vmem:[%s2 + $0xb98] sm:$0xff]
    %v389 = vld [vmem:[%s2 + $0xba0] sm:$0xff]
    %v390 = vld [vmem:[%s2 + $0xba8] sm:$0xff]
    %v391 = vld [vmem:[%s2 + $0xbb0] sm:$0xff]
    %v392 = vld [vmem:[%s2 + $0xbb8] sm:$0xff]
    %v393 = vld [vmem:[%s2 + $0xbc0] sm:$0xff]
    %v394 = vld [vmem:[%s2 + $0xbc8] sm:$0xff]
    %v395 = vld [vmem:[%s2 + $0xbd0] sm:$0xff]
    %v396 = vld [vmem:[%s2 + $0xbd8] sm:$0xff]
    %v397 = vld [vmem:[%s2 + $0xbe0] sm:$0xff]
    %v398 = vld [vmem:[%s2 + $0xbe8] sm:$0xff]
    %v399 = vld [vmem:[%s2 + $0xbf0] sm:$0xff]
    %v400 = vld [vmem:[%s2 + $0xbf8] sm:$0xff]
    %v401 = vld [vmem:[%s2 + $0xc00] sm:$0xf]
    %v402 = vld [vmem:[%s2 + $0xc08] sm:$0xf]
    %v403 = vld [vmem:[%s2 + $0xc10] sm:$0xf]
    %v404 = vld [vmem:[%s2 + $0xc18] sm:$0xf]
    %v405 = vld [vmem:[%s2 + $0xc20] sm:$0xf]
    %v406 = vld [vmem:[%s2 + $0xc28] sm:$0xf]
    %v407 = vld [vmem:[%s2 + $0xc30] sm:$0xf]
    %v408 = vld [vmem:[%s2 + $0xc38] sm:$0xf]
    %v409 = vld [vmem:[%s2 + $0xc40] sm:$0xf]
    %v410 = vld [vmem:[%s2 + $0xc48] sm:$0xf]
    %v411 = vld [vmem:[%s2 + $0xc50] sm:$0xf]
    %v412 = vld [vmem:[%s2 + $0xc58] sm:$0xf]
    %v413 = vld [vmem:[%s2 + $0xc60] sm:$0xf]
    %v414 = vld [vmem:[%s2 + $0xc68] sm:$0xf]
    %v415 = vld [vmem:[%s2 + $0xc70] sm:$0xf]
    %v416 = vld [vmem:[%s2 + $0xc78] sm:$0xf]
    %v417 = vld [vmem:[%s0] sm:$0x3]
    %v419 = vperm.slane %v417, 0
    %v420 = vperm.slane %v417, 1
    %vm422 = vcmask 556032
    %v423 = vsel %vm422, %v420, 0
    %vm425 = vcmask 1043456
    %v427 = vsel %vm425, %v401, 0
    %v430 = vsel %vm425, %v402, 0
    %v433 = vsel %vm425, %v403, 0
    %v436 = vsel %vm425, %v404, 0
    %v439 = vsel %vm425, %v405, 0
    %v442 = vsel %vm425, %v406, 0
    %v445 = vsel %vm425, %v407, 0
    %v448 = vsel %vm425, %v408, 0
    %v451 = vsel %vm425, %v409, 0
    %v454 = vsel %vm425, %v410, 0
    %v457 = vsel %vm425, %v411, 0
    %v460 = vsel %vm425, %v412, 0
    %v463 = vsel %vm425, %v413, 0
    %v466 = vsel %vm425, %v414, 0
    %v469 = vsel %vm425, %v415, 0
    %v472 = vsel %vm425, %v416, 0
    %474 = vmatpush.msra.mxu0 %v257
    %475 = vmatpush.msra.mxu0 %v241
    %476 = vmatpush.msra.mxu0 %v225
    %477 = vmatpush.msra.mxu0 %v209
    %478 = vmatpush.msra.mxu0 %v193
    %479 = vmatpush.msra.mxu0 %v177
    %480 = vmatpush.msra.mxu0 %v161
    %481 = vmatpush.msra.mxu0 %v145
    %482 = vmatpush.msra.mxu0 %v129
    %483 = vmatpush.msra.mxu0 %v113
    %484 = vmatpush.msra.mxu0 %v97
    %485 = vmatpush.msra.mxu0 %v81
    %486 = vmatpush.msra.mxu0 %v65
    %487 = vmatpush.msra.mxu0 %v49
    %488 = vmatpush.msra.mxu0 %v33
    %489 = vmatpush.msra.mxu0 %v17
    %490 = vmatmul.f32.gmra.mxu0 %v419
    %v491 = vpop.f32.mrf.mxu0
    %v492 = vadd.f32 0.0, %v491
    %493 = vdwg.mxu0
    %494 = vmatpush.msra.mxu0 0.0
    %495 = vmatpush.msra.mxu0 0.0
    %496 = vmatpush.msra.mxu0 0.0
    %497 = vmatpush.msra.mxu0 0.0
    %498 = vmatpush.msra.mxu0 0.0
    %499 = vmatpush.msra.mxu0 0.0
    %500 = vmatpush.msra.mxu0 0.0
    %501 = vmatpush.msra.mxu0 %v427
    %502 = vmatpush.msra.mxu0 %v385
    %503 = vmatpush.msra.mxu0 %v369
    %504 = vmatpush.msra.mxu0 %v353
    %505 = vmatpush.msra.mxu0 %v337
    %506 = vmatpush.msra.mxu0 %v321
    %507 = vmatpush.msra.mxu0 %v305
    %508 = vmatpush.msra.mxu0 %v289
    %509 = vmatpush.msra.mxu0 %v273
    %510 = vmatmul.f32.gmra.mxu0 %v423
    %v511 = vpop.f32.mrf.mxu0
    %v512 = vadd.f32 %v492, %v511
    %513 = vdwg.mxu0
    %514 = vmatpush.msra.mxu0 %v258
    %515 = vmatpush.msra.mxu0 %v242
    %516 = vmatpush.msra.mxu0 %v226
    %517 = vmatpush.msra.mxu0 %v210
    %518 = vmatpush.msra.mxu0 %v194
    %519 = vmatpush.msra.mxu0 %v178
    %520 = vmatpush.msra.mxu0 %v162
    %521 = vmatpush.msra.mxu0 %v146
    %522 = vmatpush.msra.mxu0 %v130
    %523 = vmatpush.msra.mxu0 %v114
    %524 = vmatpush.msra.mxu0 %v98
    %525 = vmatpush.msra.mxu0 %v82
    %526 = vmatpush.msra.mxu0 %v66
    %527 = vmatpush.msra.mxu0 %v50
    %528 = vmatpush.msra.mxu0 %v34
    %529 = vmatpush.msra.mxu0 %v18
    %530 = vmatmul.f32.gmra.mxu0 %v419
    %v531 = vpop.f32.mrf.mxu0
    %v532 = vadd.f32 0.0, %v531
    %533 = vdwg.mxu0
    %534 = vmatpush.msra.mxu0 0.0
    %535 = vmatpush.msra.mxu0 0.0
    %536 = vmatpush.msra.mxu0 0.0
    %537 = vmatpush.msra.mxu0 0.0
    %538 = vmatpush.msra.mxu0 0.0
    %539 = vmatpush.msra.mxu0 0.0
    %540 = vmatpush.msra.mxu0 0.0
    %541 = vmatpush.msra.mxu0 %v430
    %542 = vmatpush.msra.mxu0 %v386
    %543 = vmatpush.msra.mxu0 %v370
    %544 = vmatpush.msra.mxu0 %v354
    %545 = vmatpush.msra.mxu0 %v338
    %546 = vmatpush.msra.mxu0 %v322
    %547 = vmatpush.msra.mxu0 %v306
    %548 = vmatpush.msra.mxu0 %v290
    %549 = vmatpush.msra.mxu0 %v274
    %550 = vmatmul.f32.gmra.mxu0 %v423
    %v551 = vpop.f32.mrf.mxu0
    %v552 = vadd.f32 %v532, %v551
    %553 = vdwg.mxu0
    %554 = vmatpush.msra.mxu0 %v259
    %555 = vmatpush.msra.mxu0 %v243
    %556 = vmatpush.msra.mxu0 %v227
    %557 = vmatpush.msra.mxu0 %v211
    %558 = vmatpush.msra.mxu0 %v195
    %559 = vmatpush.msra.mxu0 %v179
    %560 = vmatpush.msra.mxu0 %v163
    %561 = vmatpush.msra.mxu0 %v147
    %562 = vmatpush.msra.mxu0 %v131
    %563 = vmatpush.msra.mxu0 %v115
    %564 = vmatpush.msra.mxu0 %v99
    %565 = vmatpush.msra.mxu0 %v83
    %566 = vmatpush.msra.mxu0 %v67
    %567 = vmatpush.msra.mxu0 %v51
    %568 = vmatpush.msra.mxu0 %v35
    %569 = vmatpush.msra.mxu0 %v19
    %570 = vmatmul.f32.gmra.mxu0 %v419
    %v571 = vpop.f32.mrf.mxu0
    %v572 = vadd.f32 0.0, %v571
    %573 = vdwg.mxu0
    %574 = vmatpush.msra.mxu0 0.0
    %575 = vmatpush.msra.mxu0 0.0
    %576 = vmatpush.msra.mxu0 0.0
    %577 = vmatpush.msra.mxu0 0.0
    %578 = vmatpush.msra.mxu0 0.0
    %579 = vmatpush.msra.mxu0 0.0
    %580 = vmatpush.msra.mxu0 0.0
    %581 = vmatpush.msra.mxu0 %v433
    %582 = vmatpush.msra.mxu0 %v387
    %583 = vmatpush.msra.mxu0 %v371
    %584 = vmatpush.msra.mxu0 %v355
    %585 = vmatpush.msra.mxu0 %v339
    %586 = vmatpush.msra.mxu0 %v323
    %587 = vmatpush.msra.mxu0 %v307
    %588 = vmatpush.msra.mxu0 %v291
    %589 = vmatpush.msra.mxu0 %v275
    %590 = vmatmul.f32.gmra.mxu0 %v423
    %v591 = vpop.f32.mrf.mxu0
    %v592 = vadd.f32 %v572, %v591
    %593 = vdwg.mxu0
    %594 = vmatpush.msra.mxu0 %v260
    %595 = vmatpush.msra.mxu0 %v244
    %596 = vmatpush.msra.mxu0 %v228
    %597 = vmatpush.msra.mxu0 %v212
    %598 = vmatpush.msra.mxu0 %v196
    %599 = vmatpush.msra.mxu0 %v180
    %600 = vmatpush.msra.mxu0 %v164
    %601 = vmatpush.msra.mxu0 %v148
    %602 = vmatpush.msra.mxu0 %v132
    %603 = vmatpush.msra.mxu0 %v116
    %604 = vmatpush.msra.mxu0 %v100
    %605 = vmatpush.msra.mxu0 %v84
    %606 = vmatpush.msra.mxu0 %v68
    %607 = vmatpush.msra.mxu0 %v52
    %608 = vmatpush.msra.mxu0 %v36
    %609 = vmatpush.msra.mxu0 %v20
    %610 = vmatmul.f32.gmra.mxu0 %v419
    %v611 = vpop.f32.mrf.mxu0
    %v612 = vadd.f32 0.0, %v611
    %613 = vdwg.mxu0
    %614 = vmatpush.msra.mxu0 0.0
    %615 = vmatpush.msra.mxu0 0.0
    %616 = vmatpush.msra.mxu0 0.0
    %617 = vmatpush.msra.mxu0 0.0
    %618 = vmatpush.msra.mxu0 0.0
    %619 = vmatpush.msra.mxu0 0.0
    %620 = vmatpush.msra.mxu0 0.0
    %621 = vmatpush.msra.mxu0 %v436
    %622 = vmatpush.msra.mxu0 %v388
    %623 = vmatpush.msra.mxu0 %v372
    %624 = vmatpush.msra.mxu0 %v356
    %625 = vmatpush.msra.mxu0 %v340
    %626 = vmatpush.msra.mxu0 %v324
    %627 = vmatpush.msra.mxu0 %v308
    %628 = vmatpush.msra.mxu0 %v292
    %629 = vmatpush.msra.mxu0 %v276
    %630 = vmatmul.f32.gmra.mxu0 %v423
    %v631 = vpop.f32.mrf.mxu0
    %v632 = vadd.f32 %v612, %v631
    %633 = vdwg.mxu0
    %634 = vmatpush.msra.mxu0 %v261
    %635 = vmatpush.msra.mxu0 %v245
    %636 = vmatpush.msra.mxu0 %v229
    %637 = vmatpush.msra.mxu0 %v213
    %638 = vmatpush.msra.mxu0 %v197
    %639 = vmatpush.msra.mxu0 %v181
    %640 = vmatpush.msra.mxu0 %v165
    %641 = vmatpush.msra.mxu0 %v149
    %642 = vmatpush.msra.mxu0 %v133
    %643 = vmatpush.msra.mxu0 %v117
    %644 = vmatpush.msra.mxu0 %v101
    %645 = vmatpush.msra.mxu0 %v85
    %646 = vmatpush.msra.mxu0 %v69
    %647 = vmatpush.msra.mxu0 %v53
    %648 = vmatpush.msra.mxu0 %v37
    %649 = vmatpush.msra.mxu0 %v21
    %650 = vmatmul.f32.gmra.mxu0 %v419
    %v651 = vpop.f32.mrf.mxu0
    %v652 = vadd.f32 0.0, %v651
    %653 = vdwg.mxu0
    %654 = vmatpush.msra.mxu0 0.0
    %655 = vmatpush.msra.mxu0 0.0
    %656 = vmatpush.msra.mxu0 0.0
    %657 = vmatpush.msra.mxu0 0.0
    %658 = vmatpush.msra.mxu0 0.0
    %659 = vmatpush.msra.mxu0 0.0
    %660 = vmatpush.msra.mxu0 0.0
    %661 = vmatpush.msra.mxu0 %v439
    %662 = vmatpush.msra.mxu0 %v389
    %663 = vmatpush.msra.mxu0 %v373
    %664 = vmatpush.msra.mxu0 %v357
    %665 = vmatpush.msra.mxu0 %v341
    %666 = vmatpush.msra.mxu0 %v325
    %667 = vmatpush.msra.mxu0 %v309
    %668 = vmatpush.msra.mxu0 %v293
    %669 = vmatpush.msra.mxu0 %v277
    %670 = vmatmul.f32.gmra.mxu0 %v423
    %v671 = vpop.f32.mrf.mxu0
    %v672 = vadd.f32 %v652, %v671
    %673 = vdwg.mxu0
    %674 = vmatpush.msra.mxu0 %v262
    %675 = vmatpush.msra.mxu0 %v246
    %676 = vmatpush.msra.mxu0 %v230
    %677 = vmatpush.msra.mxu0 %v214
    %678 = vmatpush.msra.mxu0 %v198
    %679 = vmatpush.msra.mxu0 %v182
    %680 = vmatpush.msra.mxu0 %v166
    %681 = vmatpush.msra.mxu0 %v150
    %682 = vmatpush.msra.mxu0 %v134
    %683 = vmatpush.msra.mxu0 %v118
    %684 = vmatpush.msra.mxu0 %v102
    %685 = vmatpush.msra.mxu0 %v86
    %686 = vmatpush.msra.mxu0 %v70
    %687 = vmatpush.msra.mxu0 %v54
    %688 = vmatpush.msra.mxu0 %v38
    %689 = vmatpush.msra.mxu0 %v22
    %690 = vmatmul.f32.gmra.mxu0 %v419
    %v691 = vpop.f32.mrf.mxu0
    %v692 = vadd.f32 0.0, %v691
    %693 = vdwg.mxu0
    %694 = vmatpush.msra.mxu0 0.0
    %695 = vmatpush.msra.mxu0 0.0
    %696 = vmatpush.msra.mxu0 0.0
    %697 = vmatpush.msra.mxu0 0.0
    %698 = vmatpush.msra.mxu0 0.0
    %699 = vmatpush.msra.mxu0 0.0
    %700 = vmatpush.msra.mxu0 0.0
    %701 = vmatpush.msra.mxu0 %v442
    %702 = vmatpush.msra.mxu0 %v390
    %703 = vmatpush.msra.mxu0 %v374
    %704 = vmatpush.msra.mxu0 %v358
    %705 = vmatpush.msra.mxu0 %v342
    %706 = vmatpush.msra.mxu0 %v326
    %707 = vmatpush.msra.mxu0 %v310
    %708 = vmatpush.msra.mxu0 %v294
    %709 = vmatpush.msra.mxu0 %v278
    %710 = vmatmul.f32.gmra.mxu0 %v423
    %v711 = vpop.f32.mrf.mxu0
    %v712 = vadd.f32 %v692, %v711
    %713 = vdwg.mxu0
    %714 = vmatpush.msra.mxu0 %v263
    %715 = vmatpush.msra.mxu0 %v247
    %716 = vmatpush.msra.mxu0 %v231
    %717 = vmatpush.msra.mxu0 %v215
    %718 = vmatpush.msra.mxu0 %v199
    %719 = vmatpush.msra.mxu0 %v183
    %720 = vmatpush.msra.mxu0 %v167
    %721 = vmatpush.msra.mxu0 %v151
    %722 = vmatpush.msra.mxu0 %v135
    %723 = vmatpush.msra.mxu0 %v119
    %724 = vmatpush.msra.mxu0 %v103
    %725 = vmatpush.msra.mxu0 %v87
    %726 = vmatpush.msra.mxu0 %v71
    %727 = vmatpush.msra.mxu0 %v55
    %728 = vmatpush.msra.mxu0 %v39
    %729 = vmatpush.msra.mxu0 %v23
    %730 = vmatmul.f32.gmra.mxu0 %v419
    %v731 = vpop.f32.mrf.mxu0
    %v732 = vadd.f32 0.0, %v731
    %733 = vdwg.mxu0
    %734 = vmatpush.msra.mxu0 0.0
    %735 = vmatpush.msra.mxu0 0.0
    %736 = vmatpush.msra.mxu0 0.0
    %737 = vmatpush.msra.mxu0 0.0
    %738 = vmatpush.msra.mxu0 0.0
    %739 = vmatpush.msra.mxu0 0.0
    %740 = vmatpush.msra.mxu0 0.0
    %741 = vmatpush.msra.mxu0 %v445
    %742 = vmatpush.msra.mxu0 %v391
    %743 = vmatpush.msra.mxu0 %v375
    %744 = vmatpush.msra.mxu0 %v359
    %745 = vmatpush.msra.mxu0 %v343
    %746 = vmatpush.msra.mxu0 %v327
    %747 = vmatpush.msra.mxu0 %v311
    %748 = vmatpush.msra.mxu0 %v295
    %749 = vmatpush.msra.mxu0 %v279
    %750 = vmatmul.f32.gmra.mxu0 %v423
    %v751 = vpop.f32.mrf.mxu0
    %v752 = vadd.f32 %v732, %v751
    %753 = vdwg.mxu0
    %754 = vmatpush.msra.mxu0 %v264
    %755 = vmatpush.msra.mxu0 %v248
    %756 = vmatpush.msra.mxu0 %v232
    %757 = vmatpush.msra.mxu0 %v216
    %758 = vmatpush.msra.mxu0 %v200
    %759 = vmatpush.msra.mxu0 %v184
    %760 = vmatpush.msra.mxu0 %v168
    %761 = vmatpush.msra.mxu0 %v152
    %762 = vmatpush.msra.mxu0 %v136
    %763 = vmatpush.msra.mxu0 %v120
    %764 = vmatpush.msra.mxu0 %v104
    %765 = vmatpush.msra.mxu0 %v88
    %766 = vmatpush.msra.mxu0 %v72
    %767 = vmatpush.msra.mxu0 %v56
    %768 = vmatpush.msra.mxu0 %v40
    %769 = vmatpush.msra.mxu0 %v24
    %770 = vmatmul.f32.gmra.mxu0 %v419
    %v771 = vpop.f32.mrf.mxu0
    %v772 = vadd.f32 0.0, %v771
    %773 = vdwg.mxu0
    %774 = vmatpush.msra.mxu0 0.0
    %775 = vmatpush.msra.mxu0 0.0
    %776 = vmatpush.msra.mxu0 0.0
    %777 = vmatpush.msra.mxu0 0.0
    %778 = vmatpush.msra.mxu0 0.0
    %779 = vmatpush.msra.mxu0 0.0
    %780 = vmatpush.msra.mxu0 0.0
    %781 = vmatpush.msra.mxu0 %v448
    %782 = vmatpush.msra.mxu0 %v392
    %783 = vmatpush.msra.mxu0 %v376
    %784 = vmatpush.msra.mxu0 %v360
    %785 = vmatpush.msra.mxu0 %v344
    %786 = vmatpush.msra.mxu0 %v328
    %787 = vmatpush.msra.mxu0 %v312
    %788 = vmatpush.msra.mxu0 %v296
    %789 = vmatpush.msra.mxu0 %v280
    %790 = vmatmul.f32.gmra.mxu0 %v423
    %v791 = vpop.f32.mrf.mxu0
    %v792 = vadd.f32 %v772, %v791
    %793 = vdwg.mxu0
    %794 = vmatpush.msra.mxu0 %v265
    %795 = vmatpush.msra.mxu0 %v249
    %796 = vmatpush.msra.mxu0 %v233
    %797 = vmatpush.msra.mxu0 %v217
    %798 = vmatpush.msra.mxu0 %v201
    %799 = vmatpush.msra.mxu0 %v185
    %800 = vmatpush.msra.mxu0 %v169
    %801 = vmatpush.msra.mxu0 %v153
    %802 = vmatpush.msra.mxu0 %v137
    %803 = vmatpush.msra.mxu0 %v121
    %804 = vmatpush.msra.mxu0 %v105
    %805 = vmatpush.msra.mxu0 %v89
    %806 = vmatpush.msra.mxu0 %v73
    %807 = vmatpush.msra.mxu0 %v57
    %808 = vmatpush.msra.mxu0 %v41
    %809 = vmatpush.msra.mxu0 %v25
    %810 = vmatmul.f32.gmra.mxu0 %v419
    %v811 = vpop.f32.mrf.mxu0
    %v812 = vadd.f32 0.0, %v811
    %813 = vdwg.mxu0
    %814 = vmatpush.msra.mxu0 0.0
    %815 = vmatpush.msra.mxu0 0.0
    %816 = vmatpush.msra.mxu0 0.0
    %817 = vmatpush.msra.mxu0 0.0
    %818 = vmatpush.msra.mxu0 0.0
    %819 = vmatpush.msra.mxu0 0.0
    %820 = vmatpush.msra.mxu0 0.0
    %821 = vmatpush.msra.mxu0 %v451
    %822 = vmatpush.msra.mxu0 %v393
    %823 = vmatpush.msra.mxu0 %v377
    %824 = vmatpush.msra.mxu0 %v361
    %825 = vmatpush.msra.mxu0 %v345
    %826 = vmatpush.msra.mxu0 %v329
    %827 = vmatpush.msra.mxu0 %v313
    %828 = vmatpush.msra.mxu0 %v297
    %829 = vmatpush.msra.mxu0 %v281
    %830 = vmatmul.f32.gmra.mxu0 %v423
    %v831 = vpop.f32.mrf.mxu0
    %v832 = vadd.f32 %v812, %v831
    %833 = vdwg.mxu0
    %834 = vmatpush.msra.mxu0 %v266
    %835 = vmatpush.msra.mxu0 %v250
    %836 = vmatpush.msra.mxu0 %v234
    %837 = vmatpush.msra.mxu0 %v218
    %838 = vmatpush.msra.mxu0 %v202
    %839 = vmatpush.msra.mxu0 %v186
    %840 = vmatpush.msra.mxu0 %v170
    %841 = vmatpush.msra.mxu0 %v154
    %842 = vmatpush.msra.mxu0 %v138
    %843 = vmatpush.msra.mxu0 %v122
    %844 = vmatpush.msra.mxu0 %v106
    %845 = vmatpush.msra.mxu0 %v90
    %846 = vmatpush.msra.mxu0 %v74
    %847 = vmatpush.msra.mxu0 %v58
    %848 = vmatpush.msra.mxu0 %v42
    %849 = vmatpush.msra.mxu0 %v26
    %850 = vmatmul.f32.gmra.mxu0 %v419
    %v851 = vpop.f32.mrf.mxu0
    %v852 = vadd.f32 0.0, %v851
    %853 = vdwg.mxu0
    %854 = vmatpush.msra.mxu0 0.0
    %855 = vmatpush.msra.mxu0 0.0
    %856 = vmatpush.msra.mxu0 0.0
    %857 = vmatpush.msra.mxu0 0.0
    %858 = vmatpush.msra.mxu0 0.0
    %859 = vmatpush.msra.mxu0 0.0
    %860 = vmatpush.msra.mxu0 0.0
    %861 = vmatpush.msra.mxu0 %v454
    %862 = vmatpush.msra.mxu0 %v394
    %863 = vmatpush.msra.mxu0 %v378
    %864 = vmatpush.msra.mxu0 %v362
    %865 = vmatpush.msra.mxu0 %v346
    %866 = vmatpush.msra.mxu0 %v330
    %867 = vmatpush.msra.mxu0 %v314
    %868 = vmatpush.msra.mxu0 %v298
    %869 = vmatpush.msra.mxu0 %v282
    %870 = vmatmul.f32.gmra.mxu0 %v423
    %v871 = vpop.f32.mrf.mxu0
    %v872 = vadd.f32 %v852, %v871
    %873 = vdwg.mxu0
    %874 = vmatpush.msra.mxu0 %v267
    %875 = vmatpush.msra.mxu0 %v251
    %876 = vmatpush.msra.mxu0 %v235
    %877 = vmatpush.msra.mxu0 %v219
    %878 = vmatpush.msra.mxu0 %v203
    %879 = vmatpush.msra.mxu0 %v187
    %880 = vmatpush.msra.mxu0 %v171
    %881 = vmatpush.msra.mxu0 %v155
    %882 = vmatpush.msra.mxu0 %v139
    %883 = vmatpush.msra.mxu0 %v123
    %884 = vmatpush.msra.mxu0 %v107
    %885 = vmatpush.msra.mxu0 %v91
    %886 = vmatpush.msra.mxu0 %v75
    %887 = vmatpush.msra.mxu0 %v59
    %888 = vmatpush.msra.mxu0 %v43
    %889 = vmatpush.msra.mxu0 %v27
    %890 = vmatmul.f32.gmra.mxu0 %v419
    %v891 = vpop.f32.mrf.mxu0
    %v892 = vadd.f32 0.0, %v891
    %893 = vdwg.mxu0
    %894 = vmatpush.msra.mxu0 0.0
    %895 = vmatpush.msra.mxu0 0.0
    %896 = vmatpush.msra.mxu0 0.0
    %897 = vmatpush.msra.mxu0 0.0
    %898 = vmatpush.msra.mxu0 0.0
    %899 = vmatpush.msra.mxu0 0.0
    %900 = vmatpush.msra.mxu0 0.0
    %901 = vmatpush.msra.mxu0 %v457
    %902 = vmatpush.msra.mxu0 %v395
    %903 = vmatpush.msra.mxu0 %v379
    %904 = vmatpush.msra.mxu0 %v363
    %905 = vmatpush.msra.mxu0 %v347
    %906 = vmatpush.msra.mxu0 %v331
    %907 = vmatpush.msra.mxu0 %v315
    %908 = vmatpush.msra.mxu0 %v299
    %909 = vmatpush.msra.mxu0 %v283
    %910 = vmatmul.f32.gmra.mxu0 %v423
    %v911 = vpop.f32.mrf.mxu0
    %v912 = vadd.f32 %v892, %v911
    %913 = vdwg.mxu0
    %914 = vmatpush.msra.mxu0 %v268
    %915 = vmatpush.msra.mxu0 %v252
    %916 = vmatpush.msra.mxu0 %v236
    %917 = vmatpush.msra.mxu0 %v220
    %918 = vmatpush.msra.mxu0 %v204
    %919 = vmatpush.msra.mxu0 %v188
    %920 = vmatpush.msra.mxu0 %v172
    %921 = vmatpush.msra.mxu0 %v156
    %922 = vmatpush.msra.mxu0 %v140
    %923 = vmatpush.msra.mxu0 %v124
    %924 = vmatpush.msra.mxu0 %v108
    %925 = vmatpush.msra.mxu0 %v92
    %926 = vmatpush.msra.mxu0 %v76
    %927 = vmatpush.msra.mxu0 %v60
    %928 = vmatpush.msra.mxu0 %v44
    %929 = vmatpush.msra.mxu0 %v28
    %930 = vmatmul.f32.gmra.mxu0 %v419
    %v931 = vpop.f32.mrf.mxu0
    %v932 = vadd.f32 0.0, %v931
    %933 = vdwg.mxu0
    %934 = vmatpush.msra.mxu0 0.0
    %935 = vmatpush.msra.mxu0 0.0
    %936 = vmatpush.msra.mxu0 0.0
    %937 = vmatpush.msra.mxu0 0.0
    %938 = vmatpush.msra.mxu0 0.0
    %939 = vmatpush.msra.mxu0 0.0
    %940 = vmatpush.msra.mxu0 0.0
    %941 = vmatpush.msra.mxu0 %v460
    %942 = vmatpush.msra.mxu0 %v396
    %943 = vmatpush.msra.mxu0 %v380
    %944 = vmatpush.msra.mxu0 %v364
    %945 = vmatpush.msra.mxu0 %v348
    %946 = vmatpush.msra.mxu0 %v332
    %947 = vmatpush.msra.mxu0 %v316
    %948 = vmatpush.msra.mxu0 %v300
    %949 = vmatpush.msra.mxu0 %v284
    %950 = vmatmul.f32.gmra.mxu0 %v423
    %v951 = vpop.f32.mrf.mxu0
    %v952 = vadd.f32 %v932, %v951
    %953 = vdwg.mxu0
    %954 = vmatpush.msra.mxu0 %v269
    %955 = vmatpush.msra.mxu0 %v253
    %956 = vmatpush.msra.mxu0 %v237
    %957 = vmatpush.msra.mxu0 %v221
    %958 = vmatpush.msra.mxu0 %v205
    %959 = vmatpush.msra.mxu0 %v189
    %960 = vmatpush.msra.mxu0 %v173
    %961 = vmatpush.msra.mxu0 %v157
    %962 = vmatpush.msra.mxu0 %v141
    %963 = vmatpush.msra.mxu0 %v125
    %964 = vmatpush.msra.mxu0 %v109
    %965 = vmatpush.msra.mxu0 %v93
    %966 = vmatpush.msra.mxu0 %v77
    %967 = vmatpush.msra.mxu0 %v61
    %968 = vmatpush.msra.mxu0 %v45
    %969 = vmatpush.msra.mxu0 %v29
    %970 = vmatmul.f32.gmra.mxu0 %v419
    %v971 = vpop.f32.mrf.mxu0
    %v972 = vadd.f32 0.0, %v971
    %973 = vdwg.mxu0
    %974 = vmatpush.msra.mxu0 0.0
    %975 = vmatpush.msra.mxu0 0.0
    %976 = vmatpush.msra.mxu0 0.0
    %977 = vmatpush.msra.mxu0 0.0
    %978 = vmatpush.msra.mxu0 0.0
    %979 = vmatpush.msra.mxu0 0.0
    %980 = vmatpush.msra.mxu0 0.0
    %981 = vmatpush.msra.mxu0 %v463
    %982 = vmatpush.msra.mxu0 %v397
    %983 = vmatpush.msra.mxu0 %v381
    %984 = vmatpush.msra.mxu0 %v365
    %985 = vmatpush.msra.mxu0 %v349
    %986 = vmatpush.msra.mxu0 %v333
    %987 = vmatpush.msra.mxu0 %v317
    %988 = vmatpush.msra.mxu0 %v301
    %989 = vmatpush.msra.mxu0 %v285
    %990 = vmatmul.f32.gmra.mxu0 %v423
    %v991 = vpop.f32.mrf.mxu0
    %v992 = vadd.f32 %v972, %v991
    %993 = vdwg.mxu0
    %994 = vmatpush.msra.mxu0 %v270
    %995 = vmatpush.msra.mxu0 %v254
    %996 = vmatpush.msra.mxu0 %v238
    %997 = vmatpush.msra.mxu0 %v222
    %998 = vmatpush.msra.mxu0 %v206
    %999 = vmatpush.msra.mxu0 %v190
    %1000 = vmatpush.msra.mxu0 %v174
    %1001 = vmatpush.msra.mxu0 %v158
    %1002 = vmatpush.msra.mxu0 %v142
    %1003 = vmatpush.msra.mxu0 %v126
    %1004 = vmatpush.msra.mxu0 %v110
    %1005 = vmatpush.msra.mxu0 %v94
    %1006 = vmatpush.msra.mxu0 %v78
    %1007 = vmatpush.msra.mxu0 %v62
    %1008 = vmatpush.msra.mxu0 %v46
    %1009 = vmatpush.msra.mxu0 %v30
    %1010 = vmatmul.f32.gmra.mxu0 %v419
    %v1011 = vpop.f32.mrf.mxu0
    %v1012 = vadd.f32 0.0, %v1011
    %1013 = vdwg.mxu0
    %1014 = vmatpush.msra.mxu0 0.0
    %1015 = vmatpush.msra.mxu0 0.0
    %1016 = vmatpush.msra.mxu0 0.0
    %1017 = vmatpush.msra.mxu0 0.0
    %1018 = vmatpush.msra.mxu0 0.0
    %1019 = vmatpush.msra.mxu0 0.0
    %1020 = vmatpush.msra.mxu0 0.0
    %1021 = vmatpush.msra.mxu0 %v466
    %1022 = vmatpush.msra.mxu0 %v398
    %1023 = vmatpush.msra.mxu0 %v382
    %1024 = vmatpush.msra.mxu0 %v366
    %1025 = vmatpush.msra.mxu0 %v350
    %1026 = vmatpush.msra.mxu0 %v334
    %1027 = vmatpush.msra.mxu0 %v318
    %1028 = vmatpush.msra.mxu0 %v302
    %1029 = vmatpush.msra.mxu0 %v286
    %1030 = vmatmul.f32.gmra.mxu0 %v423
    %v1031 = vpop.f32.mrf.mxu0
    %v1032 = vadd.f32 %v1012, %v1031
    %1033 = vdwg.mxu0
    %1034 = vmatpush.msra.mxu0 %v271
    %1035 = vmatpush.msra.mxu0 %v255
    %1036 = vmatpush.msra.mxu0 %v239
    %1037 = vmatpush.msra.mxu0 %v223
    %1038 = vmatpush.msra.mxu0 %v207
    %1039 = vmatpush.msra.mxu0 %v191
    %1040 = vmatpush.msra.mxu0 %v175
    %1041 = vmatpush.msra.mxu0 %v159
    %1042 = vmatpush.msra.mxu0 %v143
    %1043 = vmatpush.msra.mxu0 %v127
    %1044 = vmatpush.msra.mxu0 %v111
    %1045 = vmatpush.msra.mxu0 %v95
    %1046 = vmatpush.msra.mxu0 %v79
    %1047 = vmatpush.msra.mxu0 %v63
    %1048 = vmatpush.msra.mxu0 %v47
    %1049 = vmatpush.msra.mxu0 %v31
    %1050 = vmatmul.f32.gmra.mxu0 %v419
    %v1051 = vpop.f32.mrf.mxu0
    %v1052 = vadd.f32 0.0, %v1051
    %1053 = vdwg.mxu0
    %1054 = vmatpush.msra.mxu0 0.0
    %1055 = vmatpush.msra.mxu0 0.0
    %1056 = vmatpush.msra.mxu0 0.0
    %1057 = vmatpush.msra.mxu0 0.0
    %1058 = vmatpush.msra.mxu0 0.0
    %1059 = vmatpush.msra.mxu0 0.0
    %1060 = vmatpush.msra.mxu0 0.0
    %1061 = vmatpush.msra.mxu0 %v469
    %1062 = vmatpush.msra.mxu0 %v399
    %1063 = vmatpush.msra.mxu0 %v383
    %1064 = vmatpush.msra.mxu0 %v367
    %1065 = vmatpush.msra.mxu0 %v351
    %1066 = vmatpush.msra.mxu0 %v335
    %1067 = vmatpush.msra.mxu0 %v319
    %1068 = vmatpush.msra.mxu0 %v303
    %1069 = vmatpush.msra.mxu0 %v287
    %1070 = vmatmul.f32.gmra.mxu0 %v423
    %v1071 = vpop.f32.mrf.mxu0
    %v1072 = vadd.f32 %v1052, %v1071
    %1073 = vdwg.mxu0
    %1074 = vmatpush.msra.mxu0 %v272
    %1075 = vmatpush.msra.mxu0 %v256
    %1076 = vmatpush.msra.mxu0 %v240
    %1077 = vmatpush.msra.mxu0 %v224
    %1078 = vmatpush.msra.mxu0 %v208
    %1079 = vmatpush.msra.mxu0 %v192
    %1080 = vmatpush.msra.mxu0 %v176
    %1081 = vmatpush.msra.mxu0 %v160
    %1082 = vmatpush.msra.mxu0 %v144
    %1083 = vmatpush.msra.mxu0 %v128
    %1084 = vmatpush.msra.mxu0 %v112
    %1085 = vmatpush.msra.mxu0 %v96
    %1086 = vmatpush.msra.mxu0 %v80
    %1087 = vmatpush.msra.mxu0 %v64
    %1088 = vmatpush.msra.mxu0 %v48
    %1089 = vmatpush.msra.mxu0 %v32
    %1090 = vmatmul.f32.gmra.mxu0 %v419
    %v1091 = vpop.f32.mrf.mxu0
    %v1092 = vadd.f32 0.0, %v1091
    %1093 = vdwg.mxu0
    %1094 = vmatpush.msra.mxu0 0.0
    %1095 = vmatpush.msra.mxu0 0.0
    %1096 = vmatpush.msra.mxu0 0.0
    %1097 = vmatpush.msra.mxu0 0.0
    %1098 = vmatpush.msra.mxu0 0.0
    %1099 = vmatpush.msra.mxu0 0.0
    %1100 = vmatpush.msra.mxu0 0.0
    %1101 = vmatpush.msra.mxu0 %v472
    %1102 = vmatpush.msra.mxu0 %v400
    %1103 = vmatpush.msra.mxu0 %v384
    %1104 = vmatpush.msra.mxu0 %v368
    %1105 = vmatpush.msra.mxu0 %v352
    %1106 = vmatpush.msra.mxu0 %v336
    %1107 = vmatpush.msra.mxu0 %v320
    %1108 = vmatpush.msra.mxu0 %v304
    %1109 = vmatpush.msra.mxu0 %v288
    %1110 = vmatmul.f32.gmra.mxu0 %v423
    %v1111 = vpop.f32.mrf.mxu0
    %v1112 = vadd.f32 %v1092, %v1111
    %1113 = vdwg.mxu0
    %v1114 = vld [vmem:[#allocation2] sm:$0x1]
    %1116 = vset.pattern.permute.xlu0 0
    %1117 = vperm.xlu0 %1116, %v1114
    %v1118 = vpop.permute.xlu0 %1117
    %v1120 = vperm.slane %v1118, 0
    %v1121 = vadd.f32 %v512, %v1120
    %v1122 = vadd.f32 %v552, %v1120
    %v1123 = vadd.f32 %v592, %v1120
    %v1124 = vadd.f32 %v632, %v1120
    %v1125 = vadd.f32 %v672, %v1120
    %v1126 = vadd.f32 %v712, %v1120
    %v1127 = vadd.f32 %v752, %v1120
    %v1128 = vadd.f32 %v792, %v1120
    %v1129 = vadd.f32 %v832, %v1120
    %v1130 = vadd.f32 %v872, %v1120
    %v1131 = vadd.f32 %v912, %v1120
    %v1132 = vadd.f32 %v952, %v1120
    %v1133 = vadd.f32 %v992, %v1120
    %v1134 = vadd.f32 %v1032, %v1120
    %v1135 = vadd.f32 %v1072, %v1120
    %v1136 = vadd.f32 %v1112, %v1120
    %v1153 = vrot.slane %v1122, 7
    %v1154 = vrot.slane %v1123, 6
    %v1155 = vrot.slane %v1124, 5
    %v1156 = vrot.slane %v1125, 4
    %v1157 = vrot.slane %v1126, 3
    %v1158 = vrot.slane %v1127, 2
    %v1159 = vrot.slane %v1128, 1
    %v1160 = vrot.slane %v1130, 7
    %v1161 = vrot.slane %v1131, 6
    %v1162 = vrot.slane %v1132, 5
    %v1163 = vrot.slane %v1133, 4
    %v1164 = vrot.slane %v1134, 3
    %v1165 = vrot.slane %v1135, 2
    %v1166 = vrot.slane %v1136, 1
    %vm1167 = vcmask 1040384
    %v1168 = vsel %vm1167, %v1121, %v1153
    %vm1169 = vcmask 1042434
    %v1170 = vsel %vm1169, %v1154, %v1155
    %vm1171 = vcmask 1041408
    %v1172 = vsel %vm1171, %v1168, %v1170
    %vm1173 = vcmask 1044484
    %v1174 = vsel %vm1173, %v1156, %v1157
    %vm1175 = vcmask 1046534
    %v1176 = vsel %vm1175, %v1158, %v1159
    %vm1177 = vcmask 1045508
    %v1178 = vsel %vm1177, %v1174, %v1176
    %v1179 = vsel %vm425, %v1172, %v1178
    %v1180 = vsel %vm1167, %v1129, %v1160
    %v1181 = vsel %vm1169, %v1161, %v1162
    %v1182 = vsel %vm1171, %v1180, %v1181
    %v1183 = vsel %vm1173, %v1163, %v1164
    %v1184 = vsel %vm1175, %v1165, %v1166
    %v1185 = vsel %vm1177, %v1183, %v1184
    %v1186 = vsel %vm425, %v1182, %v1185
    %1189 = vst [vmem:[#allocation3] sm:$0xff] %v1179
    %1190 = vst [vmem:[#allocation3 + $0x8] sm:$0xff] %v1186
    // Predicated region
    $region14: #{tpu_custom_call.1} parent=1 // pred_check
      _
    $region15: #{tpu_custom_call.1} parent=1 // pred_check_branch
      %1192 = sbr.rel (0) target = $region17
    $region16: #{tpu_custom_call.1} parent=1 // pred_region
      %1194 = vsyncadd [#allocation4], 0
      %s1196 = sshll.u32 [#allocation3], 4
      %s1197 = int_to_ptr.vmem [resolvable:$true] %s1196
      %s1198 = sshll.u32 %s3, 4
      %s1199 = int_to_ptr.hbm [resolvable:$true] %s1198
      %1201 = dma.vmem_to_hbm [thread:$0]  %s1197, 256, %s1199, [#allocation4]
    $region17: #{tpu_custom_call.1} parent=1 // pred_fallthru
      _
    // Predicated region
    $region18: #{tpu_custom_call.1} parent=1 // pred_check
      _
    $region19: #{tpu_custom_call.1} parent=1 // pred_check_branch
      %1203 = sbr.rel (0) target = $region21
    $region20: #{tpu_custom_call.1} parent=1 // pred_region
      %1205 = dma.done [#allocation4], 256
    $region21: #{tpu_custom_call.1} parent=1 // pred_fallthru
      _
    %1206 = vsyncpa [#allocation4], 1

</llo_original>
